<compile_context>
chip_gen: v7x
topology: tpu7x:2x2x1
jax: 0.10.0
libtpu: 0.0.40
codegen_flags: <defaults>
</compile_context>

<pallas_src>
import functools
import math

import jax
import jax.numpy as jnp
import numpy as np
from jax.experimental import pallas as pl
from jax.experimental.pallas import tpu as pltpu

LN_EPS = 1e-5  # PyTorch nn.LayerNorm default


def _layernorm(h, w, b):
    mu = jnp.mean(h, axis=-1, keepdims=True)
    var = jnp.mean((h - mu) ** 2, axis=-1, keepdims=True)
    return (h - mu) * jax.lax.rsqrt(var + LN_EPS) * w + b


def _gelu_exact(x):
    # PyTorch nn.GELU default == exact erf formulation
    return 0.5 * x * (1.0 + jax.lax.erf(x * (1.0 / math.sqrt(2.0))))


def fractal_block_kernel(
    x_ref,                         # (BB, S, D)
    ln1w_ref, ln1b_ref,            # (1, D) each
    wqkv_ref,                      # (D, 3D) = [Wq*scale | Wk | Wv], qkv_bias=False
    wo_ref, bo_ref,                # (D, D), (1, D)
    ln2w_ref, ln2b_ref,            # (1, D) each
    w1_ref, b1_ref,                # (D, I), (1, I)
    w2_ref, b2_ref,                # (I, D), (1, D)
    o_ref,                         # (BB, S, D)
    *, num_heads: int,
):
    BB, S, D = x_ref.shape
    hd = D // num_heads
    R = BB * S
    mm = wqkv_ref.dtype            # matmul operand dtype (f32 or bf16)

    x = x_ref[...].reshape(R, D).astype(jnp.float32)          # (R, D)

    # ---- norm1 + fused QKV projection ----
    xn = _layernorm(x, ln1w_ref[...], ln1b_ref[...])
    qkv = jnp.dot(xn.astype(mm), wqkv_ref[...],
                  preferred_element_type=jnp.float32)          # (R, 3D)
    qkv3 = qkv.reshape(BB, S, 3 * D)

    # Stack heads onto a leading batch axis: (num_heads*BB, S, hd).
    def split_heads(base):
        return jnp.concatenate(
            [qkv3[:, :, base + h * hd: base + (h + 1) * hd]
             for h in range(num_heads)], axis=0)

    qh = split_heads(0)            # already scaled by 1/sqrt(hd) (folded into Wq)
    kh = split_heads(D)
    vh = split_heads(2 * D)

    # ---- attention, batched over (head, batch-element) ----
    s = jnp.einsum('bqd,bkd->bqk', qh, kh,
                   preferred_element_type=jnp.float32)         # (H*BB, S, S)
    s = s - jnp.max(s, axis=-1, keepdims=True)
    p = jnp.exp(s)
    p = p * pl.reciprocal(jnp.sum(p, axis=-1, keepdims=True), approx=True)
    a = jnp.einsum('bqk,bkd->bqd', p, vh,
                   preferred_element_type=jnp.float32)         # (H*BB, S, hd)

    # Re-interleave heads back into lanes: (BB, S, D) -> (R, D)
    attn = jnp.concatenate(
        [a[h * BB:(h + 1) * BB] for h in range(num_heads)], axis=-1)
    attn = attn.reshape(R, D)

    attn_out = jnp.dot(attn.astype(mm), wo_ref[...],
                       preferred_element_type=jnp.float32) + bo_ref[...]
    # projection_dropout = 0.0 -> identity

    h1 = attn_out + x                                          # residual 1

    # ---- norm2 + MLP ----
    hn2 = _layernorm(h1, ln2w_ref[...], ln2b_ref[...])
    m = jnp.dot(hn2.astype(mm), w1_ref[...],
                preferred_element_type=jnp.float32) + b1_ref[...]
    m = _gelu_exact(m)
    m = jnp.dot(m.astype(mm), w2_ref[...],
                preferred_element_type=jnp.float32) + b2_ref[...]

    o_ref[...] = (m + h1).reshape(BB, S, D).astype(o_ref.dtype)  # residual 2


def _pick_batch_tile(batch, seq, row_target=256):
    """Largest divisor of `batch` whose flattened row count bb*seq <= row_target."""
    bb = 1
    for cand in range(1, batch + 1):
        if batch % cand == 0 and cand * seq <= max(seq, row_target):
            bb = cand
    return bb


def fractal_transformer_block(x, params, num_heads, *, matmul_dtype=jnp.float32):
    B, S, D = x.shape
    I = params["w1"].shape[1]
    hd = D // num_heads
    BB = _pick_batch_tile(B, S)

    # Host-side packing: fuse QKV into one weight; fold 1/sqrt(hd) into Wq.
    scale = 1.0 / math.sqrt(hd)
    wqkv = jnp.concatenate(
        [params["wq"] * scale, params["wk"], params["wv"]], axis=1
    ).astype(matmul_dtype)
    wo = params["wo"].astype(matmul_dtype)
    w1 = params["w1"].astype(matmul_dtype)
    w2 = params["w2"].astype(matmul_dtype)

    kernel = functools.partial(fractal_block_kernel, num_heads=num_heads)

    def rep(shape):
        # whole-array block, same block index for every grid step
        n = len(shape)

        def idx(b):
            return (0,) * n

        return pl.BlockSpec(shape, idx)

    return pl.pallas_call(
        kernel,
        out_shape=jax.ShapeDtypeStruct((B, S, D), x.dtype),
        grid=(B // BB,),
        in_specs=[
            pl.BlockSpec((BB, S, D), lambda b: (b, 0, 0)),   # x
            rep((1, D)), rep((1, D)),                        # ln1 w, b
            rep((D, 3 * D)),                                 # Wqkv (scaled Wq)
            rep((D, D)), rep((1, D)),                        # Wo, bo
            rep((1, D)), rep((1, D)),                        # ln2 w, b
            rep((D, I)), rep((1, I)),                        # W1, b1
            rep((I, D)), rep((1, D)),                        # W2, b2
        ],
        out_specs=pl.BlockSpec((BB, S, D), lambda b: (b, 0, 0)),
        compiler_params=pltpu.CompilerParams(
            dimension_semantics=("parallel",),
            # Explicit VMEM budget so double-buffered weight blocks stay inside
            # the scoped limit on all generations (v7x: 64 MiB/TC physical).
            vmem_limit_bytes=48 * 1024 * 1024,
        ),
        # TODO(synk): for large D/I, K-tile W1/W2 with a reduction grid axis
        # instead of whole-array weight blocks (fine at small hidden dims).
    )(
        x,
        params["ln1_w"], params["ln1_b"],
        wqkv,
        wo, params["bo"],
        params["ln2_w"], params["ln2_b"],
        w1, params["b1"],
        w2, params["b2"],
    )


def reference_block(x, params, num_heads):
    """Pure-JAX reference mirroring the PyTorch forward."""
    B, S, D = x.shape
    hd = D // num_heads

    def ln(h, w, b):
        mu = jnp.mean(h, axis=-1, keepdims=True)
        var = jnp.mean((h - mu) ** 2, axis=-1, keepdims=True)
        return (h - mu) / jnp.sqrt(var + LN_EPS) * w + b

    xn = ln(x, params["ln1_w"], params["ln1_b"])
    q = xn @ params["wq"]
    k = xn @ params["wk"]
    v = xn @ params["wv"]
    q = q.reshape(B, S, num_heads, hd).transpose(0, 2, 1, 3)
    k = k.reshape(B, S, num_heads, hd).transpose(0, 2, 1, 3)
    v = v.reshape(B, S, num_heads, hd).transpose(0, 2, 1, 3)
    s = jnp.einsum("bhqd,bhkd->bhqk", q, k) / math.sqrt(hd)
    p = jax.nn.softmax(s, axis=-1)
    a = jnp.einsum("bhqk,bhkd->bhqd", p, v)
    a = a.transpose(0, 2, 1, 3).reshape(B, S, D)
    attn_out = a @ params["wo"] + params["bo"]
    h1 = attn_out + x
    hn2 = ln(h1, params["ln2_w"], params["ln2_b"])
    m = hn2 @ params["w1"] + params["b1"]
    m = 0.5 * m * (1.0 + jax.lax.erf(m / math.sqrt(2.0)))
    m = m @ params["w2"] + params["b2"]
    return m + h1


if __name__ == "__main__":
    # Small shapes consistent with the module
    B, S, D = 2, 8, 32
    num_heads = 4
    mlp_ratio = 4.0
    I = int(D * mlp_ratio)  # 128

    key = jax.random.PRNGKey(0)
    ks = jax.random.split(key, 16)

    def rand(k, shape, scale=0.02):
        return (scale * jax.random.normal(k, shape)).astype(jnp.float32)

    params = {
        # LayerNorm affine params (stored as (1, D) for broadcast inside kernel)
        "ln1_w": 1.0 + rand(ks[0], (1, D)),
        "ln1_b": rand(ks[1], (1, D)),
        "ln2_w": 1.0 + rand(ks[2], (1, D)),
        "ln2_b": rand(ks[3], (1, D)),
        # Attention: qkv_bias=False (default); to_o has a bias.
        # All weights are (in_dim, out_dim), i.e. torch weight transposed.
        "wq": rand(ks[4], (D, D), 0.05),
        "wk": rand(ks[5], (D, D), 0.05),
        "wv": rand(ks[6], (D, D), 0.05),
        "wo": rand(ks[7], (D, D), 0.05),
        "bo": rand(ks[8], (1, D)),
        # MLP
        "w1": rand(ks[9], (D, I), 0.05),
        "b1": rand(ks[10], (1, I)),
        "w2": rand(ks[11], (I, D), 0.05),
        "b2": rand(ks[12], (1, D)),
    }

    x = jax.random.normal(ks[13], (B, S, D), dtype=jnp.float32)

    out = jax.block_until_ready(fractal_transformer_block(x, params, num_heads))
    ref = jax.block_until_ready(reference_block(x, params, num_heads))
    np.testing.assert_allclose(np.asarray(out), np.asarray(ref), rtol=5e-4, atol=5e-4)

    print("KERNEL_OK")
</pallas_src>

<mosaic_0001>
module attributes {stable_mosaic.version = 11 : i64} {
  func.func @fractal_block_kernel(%arg0: i32, %arg1: memref<2x8x32xf32, #tpu.memory_space<vmem>>, %arg2: memref<1x32xf32, #tpu.memory_space<vmem>>, %arg3: memref<1x32xf32, #tpu.memory_space<vmem>>, %arg4: memref<32x96xf32, #tpu.memory_space<vmem>>, %arg5: memref<32x32xf32, #tpu.memory_space<vmem>>, %arg6: memref<1x32xf32, #tpu.memory_space<vmem>>, %arg7: memref<1x32xf32, #tpu.memory_space<vmem>>, %arg8: memref<1x32xf32, #tpu.memory_space<vmem>>, %arg9: memref<32x128xf32, #tpu.memory_space<vmem>>, %arg10: memref<1x128xf32, #tpu.memory_space<vmem>>, %arg11: memref<128x32xf32, #tpu.memory_space<vmem>>, %arg12: memref<1x32xf32, #tpu.memory_space<vmem>>, %arg13: memref<2x8x32xf32, #tpu.memory_space<vmem>>) attributes {dimension_semantics = [#tpu.dimension_semantics<parallel>], iteration_bounds = array<i64: 1>, scalar_prefetch = 0 : i64, scratch_operands = 0 : i64, tpu.core_type = #tpu.core_type<tc>, window_params = [{transform_indices = @transform_0, window_bounds = array<i64: 2, 8, 32>}, {pipeline_mode = #tpu.pipeline_mode<synchronous>, transform_indices = @transform_1, window_bounds = array<i64: 1, 32>}, {pipeline_mode = #tpu.pipeline_mode<synchronous>, transform_indices = @transform_2, window_bounds = array<i64: 1, 32>}, {pipeline_mode = #tpu.pipeline_mode<synchronous>, transform_indices = @transform_3, window_bounds = array<i64: 32, 96>}, {pipeline_mode = #tpu.pipeline_mode<synchronous>, transform_indices = @transform_4, window_bounds = array<i64: 32, 32>}, {pipeline_mode = #tpu.pipeline_mode<synchronous>, transform_indices = @transform_5, window_bounds = array<i64: 1, 32>}, {pipeline_mode = #tpu.pipeline_mode<synchronous>, transform_indices = @transform_6, window_bounds = array<i64: 1, 32>}, {pipeline_mode = #tpu.pipeline_mode<synchronous>, transform_indices = @transform_7, window_bounds = array<i64: 1, 32>}, {pipeline_mode = #tpu.pipeline_mode<synchronous>, transform_indices = @transform_8, window_bounds = array<i64: 32, 128>}, {pipeline_mode = #tpu.pipeline_mode<synchronous>, transform_indices = @transform_9, window_bounds = array<i64: 1, 128>}, {pipeline_mode = #tpu.pipeline_mode<synchronous>, transform_indices = @transform_10, window_bounds = array<i64: 128, 32>}, {pipeline_mode = #tpu.pipeline_mode<synchronous>, transform_indices = @transform_11, window_bounds = array<i64: 1, 32>}, {transform_indices = @transform_12, window_bounds = array<i64: 2, 8, 32>}]} {
    %c0 = arith.constant 0 : index
    %c0_0 = arith.constant 0 : index
    %c0_1 = arith.constant 0 : index
    %0 = vector.load %arg1[%c0, %c0_0, %c0_1] : memref<2x8x32xf32, #tpu.memory_space<vmem>>, vector<2x8x32xf32>
    %1 = vector.shape_cast %0 : vector<2x8x32xf32> to vector<16x32xf32>
    %c0_2 = arith.constant 0 : index
    %c0_3 = arith.constant 0 : index
    %2 = vector.load %arg2[%c0_2, %c0_3] : memref<1x32xf32, #tpu.memory_space<vmem>>, vector<1x32xf32>
    %c0_4 = arith.constant 0 : index
    %c0_5 = arith.constant 0 : index
    %3 = vector.load %arg3[%c0_4, %c0_5] : memref<1x32xf32, #tpu.memory_space<vmem>>, vector<1x32xf32>
    %cst = arith.constant dense<0.000000e+00> : vector<16xf32>
    %4 = vector.multi_reduction <add>, %1, %cst [1] : vector<16x32xf32> to vector<16xf32>
    %5 = vector.shape_cast %4 : vector<16xf32> to vector<16x1xf32>
    %cst_6 = arith.constant 3.200000e+01 : f32
    %6 = vector.broadcast %cst_6 : f32 to vector<16x1xf32>
    %7 = arith.divf %5, %6 : vector<16x1xf32>
    %8 = vector.broadcast %7 : vector<16x1xf32> to vector<16x32xf32>
    %9 = arith.subf %1, %8 : vector<16x32xf32>
    %10 = arith.mulf %9, %9 : vector<16x32xf32>
    %cst_7 = arith.constant dense<0.000000e+00> : vector<16xf32>
    %11 = vector.multi_reduction <add>, %10, %cst_7 [1] : vector<16x32xf32> to vector<16xf32>
    %12 = vector.shape_cast %11 : vector<16xf32> to vector<16x1xf32>
    %cst_8 = arith.constant 3.200000e+01 : f32
    %13 = vector.broadcast %cst_8 : f32 to vector<16x1xf32>
    %14 = arith.divf %12, %13 : vector<16x1xf32>
    %15 = vector.broadcast %7 : vector<16x1xf32> to vector<16x32xf32>
    %16 = arith.subf %1, %15 : vector<16x32xf32>
    %cst_9 = arith.constant 9.99999974E-6 : f32
    %17 = vector.broadcast %cst_9 : f32 to vector<16x1xf32>
    %18 = arith.addf %14, %17 : vector<16x1xf32>
    %19 = math.rsqrt %18 : vector<16x1xf32>
    %20 = vector.broadcast %19 : vector<16x1xf32> to vector<16x32xf32>
    %21 = arith.mulf %16, %20 : vector<16x32xf32>
    %22 = vector.broadcast %2 : vector<1x32xf32> to vector<16x32xf32>
    %23 = arith.mulf %21, %22 : vector<16x32xf32>
    %24 = vector.broadcast %3 : vector<1x32xf32> to vector<16x32xf32>
    %25 = arith.addf %23, %24 : vector<16x32xf32>
    %c0_10 = arith.constant 0 : index
    %c0_11 = arith.constant 0 : index
    %26 = vector.load %arg4[%c0_10, %c0_11] : memref<32x96xf32, #tpu.memory_space<vmem>>, vector<32x96xf32>
    %cst_12 = arith.constant dense<0.000000e+00> : vector<16x96xf32>
    %27 = tpu.matmul %25, %26, %cst_12 {dimension_numbers = #tpu.dot_dimension_numbers<[1], [0], [0], [1], [0, 0, 1, 1], [], []>} : vector<16x32xf32>, vector<32x96xf32>, vector<16x96xf32> -> vector<16x96xf32>
    %28 = vector.shape_cast %27 : vector<16x96xf32> to vector<2x8x96xf32>
    %29 = vector.extract_strided_slice %28 {offsets = [0, 0, 0], sizes = [2, 8, 8], strides = [1, 1, 1]} : vector<2x8x96xf32> to vector<2x8x8xf32>
    %30 = vector.extract_strided_slice %28 {offsets = [0, 0, 8], sizes = [2, 8, 8], strides = [1, 1, 1]} : vector<2x8x96xf32> to vector<2x8x8xf32>
    %31 = vector.extract_strided_slice %28 {offsets = [0, 0, 16], sizes = [2, 8, 8], strides = [1, 1, 1]} : vector<2x8x96xf32> to vector<2x8x8xf32>
    %32 = vector.extract_strided_slice %28 {offsets = [0, 0, 24], sizes = [2, 8, 8], strides = [1, 1, 1]} : vector<2x8x96xf32> to vector<2x8x8xf32>
    %33 = tpu.concatenate %29, %30, %31, %32 in 0 : vector<2x8x8xf32>, vector<2x8x8xf32>, vector<2x8x8xf32>, vector<2x8x8xf32> -> vector<8x8x8xf32>
    %34 = vector.extract_strided_slice %28 {offsets = [0, 0, 32], sizes = [2, 8, 8], strides = [1, 1, 1]} : vector<2x8x96xf32> to vector<2x8x8xf32>
    %35 = vector.extract_strided_slice %28 {offsets = [0, 0, 40], sizes = [2, 8, 8], strides = [1, 1, 1]} : vector<2x8x96xf32> to vector<2x8x8xf32>
    %36 = vector.extract_strided_slice %28 {offsets = [0, 0, 48], sizes = [2, 8, 8], strides = [1, 1, 1]} : vector<2x8x96xf32> to vector<2x8x8xf32>
    %37 = vector.extract_strided_slice %28 {offsets = [0, 0, 56], sizes = [2, 8, 8], strides = [1, 1, 1]} : vector<2x8x96xf32> to vector<2x8x8xf32>
    %38 = tpu.concatenate %34, %35, %36, %37 in 0 : vector<2x8x8xf32>, vector<2x8x8xf32>, vector<2x8x8xf32>, vector<2x8x8xf32> -> vector<8x8x8xf32>
    %39 = vector.extract_strided_slice %28 {offsets = [0, 0, 64], sizes = [2, 8, 8], strides = [1, 1, 1]} : vector<2x8x96xf32> to vector<2x8x8xf32>
    %40 = vector.extract_strided_slice %28 {offsets = [0, 0, 72], sizes = [2, 8, 8], strides = [1, 1, 1]} : vector<2x8x96xf32> to vector<2x8x8xf32>
    %41 = vector.extract_strided_slice %28 {offsets = [0, 0, 80], sizes = [2, 8, 8], strides = [1, 1, 1]} : vector<2x8x96xf32> to vector<2x8x8xf32>
    %42 = vector.extract_strided_slice %28 {offsets = [0, 0, 88], sizes = [2, 8, 8], strides = [1, 1, 1]} : vector<2x8x96xf32> to vector<2x8x8xf32>
    %43 = tpu.concatenate %39, %40, %41, %42 in 0 : vector<2x8x8xf32>, vector<2x8x8xf32>, vector<2x8x8xf32>, vector<2x8x8xf32> -> vector<8x8x8xf32>
    "tpu.trace_start"() <{level = 10 : i32, message = "bqd,bkd->bqk"}> : () -> ()
    %cst_13 = arith.constant dense<0.000000e+00> : vector<8x8x8xf32>
    %44 = tpu.matmul %33, %38, %cst_13 {dimension_numbers = #tpu.dot_dimension_numbers<[2], [2], [1], [1], [0, 0, 0, 1, 1, 1], [0], [0]>} : vector<8x8x8xf32>, vector<8x8x8xf32>, vector<8x8x8xf32> -> vector<8x8x8xf32>
    "tpu.trace_stop"() : () -> ()
    %cst_14 = arith.constant dense<0xFF800000> : vector<8x8xf32>
    %45 = vector.multi_reduction <maximumf>, %44, %cst_14 [2] : vector<8x8x8xf32> to vector<8x8xf32>
    %46 = vector.shape_cast %45 : vector<8x8xf32> to vector<8x8x1xf32>
    %47 = vector.broadcast %46 : vector<8x8x1xf32> to vector<8x8x8xf32>
    %48 = arith.subf %44, %47 : vector<8x8x8xf32>
    %49 = math.exp %48 : vector<8x8x8xf32>
    %cst_15 = arith.constant dense<0.000000e+00> : vector<8x8xf32>
    %50 = vector.multi_reduction <add>, %49, %cst_15 [2] : vector<8x8x8xf32> to vector<8x8xf32>
    %51 = vector.shape_cast %50 : vector<8x8xf32> to vector<8x8x1xf32>
    %52 = tpu.reciprocal %51 {approx = true} : vector<8x8x1xf32> -> vector<8x8x1xf32>
    %53 = vector.broadcast %52 : vector<8x8x1xf32> to vector<8x8x8xf32>
    %54 = arith.mulf %49, %53 : vector<8x8x8xf32>
    "tpu.trace_start"() <{level = 10 : i32, message = "bqk,bkd->bqd"}> : () -> ()
    %cst_16 = arith.constant dense<0.000000e+00> : vector<8x8x8xf32>
    %55 = tpu.matmul %54, %43, %cst_16 {dimension_numbers = #tpu.dot_dimension_numbers<[2], [1], [1], [2], [0, 0, 0, 1, 1, 2], [0], [0]>} : vector<8x8x8xf32>, vector<8x8x8xf32>, vector<8x8x8xf32> -> vector<8x8x8xf32>
    "tpu.trace_stop"() : () -> ()
    %56 = vector.extract_strided_slice %55 {offsets = [0, 0, 0], sizes = [2, 8, 8], strides = [1, 1, 1]} : vector<8x8x8xf32> to vector<2x8x8xf32>
    %57 = vector.extract_strided_slice %55 {offsets = [2, 0, 0], sizes = [2, 8, 8], strides = [1, 1, 1]} : vector<8x8x8xf32> to vector<2x8x8xf32>
    %58 = vector.extract_strided_slice %55 {offsets = [4, 0, 0], sizes = [2, 8, 8], strides = [1, 1, 1]} : vector<8x8x8xf32> to vector<2x8x8xf32>
    %59 = vector.extract_strided_slice %55 {offsets = [6, 0, 0], sizes = [2, 8, 8], strides = [1, 1, 1]} : vector<8x8x8xf32> to vector<2x8x8xf32>
    %60 = tpu.concatenate %56, %57, %58, %59 in 2 : vector<2x8x8xf32>, vector<2x8x8xf32>, vector<2x8x8xf32>, vector<2x8x8xf32> -> vector<2x8x32xf32>
    %61 = vector.shape_cast %60 : vector<2x8x32xf32> to vector<16x32xf32>
    %c0_17 = arith.constant 0 : index
    %c0_18 = arith.constant 0 : index
    %62 = vector.load %arg5[%c0_17, %c0_18] : memref<32x32xf32, #tpu.memory_space<vmem>>, vector<32x32xf32>
    %cst_19 = arith.constant dense<0.000000e+00> : vector<16x32xf32>
    %63 = tpu.matmul %61, %62, %cst_19 {dimension_numbers = #tpu.dot_dimension_numbers<[1], [0], [0], [1], [0, 0, 1, 1], [], []>} : vector<16x32xf32>, vector<32x32xf32>, vector<16x32xf32> -> vector<16x32xf32>
    %c0_20 = arith.constant 0 : index
    %c0_21 = arith.constant 0 : index
    %64 = vector.load %arg6[%c0_20, %c0_21] : memref<1x32xf32, #tpu.memory_space<vmem>>, vector<1x32xf32>
    %65 = vector.broadcast %64 : vector<1x32xf32> to vector<16x32xf32>
    %66 = arith.addf %63, %65 : vector<16x32xf32>
    %67 = arith.addf %66, %1 : vector<16x32xf32>
    %c0_22 = arith.constant 0 : index
    %c0_23 = arith.constant 0 : index
    %68 = vector.load %arg7[%c0_22, %c0_23] : memref<1x32xf32, #tpu.memory_space<vmem>>, vector<1x32xf32>
    %c0_24 = arith.constant 0 : index
    %c0_25 = arith.constant 0 : index
    %69 = vector.load %arg8[%c0_24, %c0_25] : memref<1x32xf32, #tpu.memory_space<vmem>>, vector<1x32xf32>
    %cst_26 = arith.constant dense<0.000000e+00> : vector<16xf32>
    %70 = vector.multi_reduction <add>, %67, %cst_26 [1] : vector<16x32xf32> to vector<16xf32>
    %71 = vector.shape_cast %70 : vector<16xf32> to vector<16x1xf32>
    %cst_27 = arith.constant 3.200000e+01 : f32
    %72 = vector.broadcast %cst_27 : f32 to vector<16x1xf32>
    %73 = arith.divf %71, %72 : vector<16x1xf32>
    %74 = vector.broadcast %73 : vector<16x1xf32> to vector<16x32xf32>
    %75 = arith.subf %67, %74 : vector<16x32xf32>
    %76 = arith.mulf %75, %75 : vector<16x32xf32>
    %cst_28 = arith.constant dense<0.000000e+00> : vector<16xf32>
    %77 = vector.multi_reduction <add>, %76, %cst_28 [1] : vector<16x32xf32> to vector<16xf32>
    %78 = vector.shape_cast %77 : vector<16xf32> to vector<16x1xf32>
    %cst_29 = arith.constant 3.200000e+01 : f32
    %79 = vector.broadcast %cst_29 : f32 to vector<16x1xf32>
    %80 = arith.divf %78, %79 : vector<16x1xf32>
    %81 = vector.broadcast %73 : vector<16x1xf32> to vector<16x32xf32>
    %82 = arith.subf %67, %81 : vector<16x32xf32>
    %cst_30 = arith.constant 9.99999974E-6 : f32
    %83 = vector.broadcast %cst_30 : f32 to vector<16x1xf32>
    %84 = arith.addf %80, %83 : vector<16x1xf32>
    %85 = math.rsqrt %84 : vector<16x1xf32>
    %86 = vector.broadcast %85 : vector<16x1xf32> to vector<16x32xf32>
    %87 = arith.mulf %82, %86 : vector<16x32xf32>
    %88 = vector.broadcast %68 : vector<1x32xf32> to vector<16x32xf32>
    %89 = arith.mulf %87, %88 : vector<16x32xf32>
    %90 = vector.broadcast %69 : vector<1x32xf32> to vector<16x32xf32>
    %91 = arith.addf %89, %90 : vector<16x32xf32>
    %c0_31 = arith.constant 0 : index
    %c0_32 = arith.constant 0 : index
    %92 = vector.load %arg9[%c0_31, %c0_32] : memref<32x128xf32, #tpu.memory_space<vmem>>, vector<32x128xf32>
    %cst_33 = arith.constant dense<0.000000e+00> : vector<16x128xf32>
    %93 = tpu.matmul %91, %92, %cst_33 {dimension_numbers = #tpu.dot_dimension_numbers<[1], [0], [0], [1], [0, 0, 1, 1], [], []>} : vector<16x32xf32>, vector<32x128xf32>, vector<16x128xf32> -> vector<16x128xf32>
    %c0_34 = arith.constant 0 : index
    %c0_35 = arith.constant 0 : index
    %94 = vector.load %arg10[%c0_34, %c0_35] : memref<1x128xf32, #tpu.memory_space<vmem>>, vector<1x128xf32>
    %95 = vector.broadcast %94 : vector<1x128xf32> to vector<16x128xf32>
    %96 = arith.addf %93, %95 : vector<16x128xf32>
    %cst_36 = arith.constant 5.000000e-01 : f32
    %97 = vector.broadcast %cst_36 : f32 to vector<16x128xf32>
    %98 = arith.mulf %97, %96 : vector<16x128xf32>
    %cst_37 = arith.constant 0.707106769 : f32
    %99 = vector.broadcast %cst_37 : f32 to vector<16x128xf32>
    %100 = arith.mulf %96, %99 : vector<16x128xf32>
    %101 = math.erf %100 : vector<16x128xf32>
    %cst_38 = arith.constant 1.000000e+00 : f32
    %102 = vector.broadcast %cst_38 : f32 to vector<16x128xf32>
    %103 = arith.addf %102, %101 : vector<16x128xf32>
    %104 = arith.mulf %98, %103 : vector<16x128xf32>
    %c0_39 = arith.constant 0 : index
    %c0_40 = arith.constant 0 : index
    %105 = vector.load %arg11[%c0_39, %c0_40] : memref<128x32xf32, #tpu.memory_space<vmem>>, vector<128x32xf32>
    %cst_41 = arith.constant dense<0.000000e+00> : vector<16x32xf32>
    %106 = tpu.matmul %104, %105, %cst_41 {dimension_numbers = #tpu.dot_dimension_numbers<[1], [0], [0], [1], [0, 0, 1, 1], [], []>} : vector<16x128xf32>, vector<128x32xf32>, vector<16x32xf32> -> vector<16x32xf32>
    %c0_42 = arith.constant 0 : index
    %c0_43 = arith.constant 0 : index
    %107 = vector.load %arg12[%c0_42, %c0_43] : memref<1x32xf32, #tpu.memory_space<vmem>>, vector<1x32xf32>
    %108 = vector.broadcast %107 : vector<1x32xf32> to vector<16x32xf32>
    %109 = arith.addf %106, %108 : vector<16x32xf32>
    %110 = arith.addf %109, %67 : vector<16x32xf32>
    %111 = vector.shape_cast %110 : vector<16x32xf32> to vector<2x8x32xf32>
    %c0_44 = arith.constant 0 : index
    %c0_45 = arith.constant 0 : index
    %c0_46 = arith.constant 0 : index
    %112 = vector.load %arg13[%c0_44, %c0_45, %c0_46] : memref<2x8x32xf32, #tpu.memory_space<vmem>>, vector<2x8x32xf32>
    tpu.vector_store %arg13[%c0_44, %c0_45, %c0_46], %111 {strides = array<i32>} : memref<2x8x32xf32, #tpu.memory_space<vmem>>, vector<2x8x32xf32>,
    return
  }
  func.func @transform_0(%arg0: i32) -> (i32, i32, i32) {
    %c0_i32 = arith.constant 0 : i32
    %c0_i32_0 = arith.constant 0 : i32
    %c0_i32_1 = arith.constant 0 : i32
    return %arg0, %c0_i32, %c0_i32_0 : i32, i32, i32
  }
  func.func @transform_1(%arg0: i32) -> (i32, i32) {
    %c0_i32 = arith.constant 0 : i32
    %c0_i32_0 = arith.constant 0 : i32
    %c0_i32_1 = arith.constant 0 : i32
    return %c0_i32, %c0_i32_0 : i32, i32
  }
  func.func @transform_2(%arg0: i32) -> (i32, i32) {
    %c0_i32 = arith.constant 0 : i32
    %c0_i32_0 = arith.constant 0 : i32
    %c0_i32_1 = arith.constant 0 : i32
    return %c0_i32, %c0_i32_0 : i32, i32
  }
  func.func @transform_3(%arg0: i32) -> (i32, i32) {
    %c0_i32 = arith.constant 0 : i32
    %c0_i32_0 = arith.constant 0 : i32
    %c0_i32_1 = arith.constant 0 : i32
    return %c0_i32, %c0_i32_0 : i32, i32
  }
  func.func @transform_4(%arg0: i32) -> (i32, i32) {
    %c0_i32 = arith.constant 0 : i32
    %c0_i32_0 = arith.constant 0 : i32
    %c0_i32_1 = arith.constant 0 : i32
    return %c0_i32, %c0_i32_0 : i32, i32
  }
  func.func @transform_5(%arg0: i32) -> (i32, i32) {
    %c0_i32 = arith.constant 0 : i32
    %c0_i32_0 = arith.constant 0 : i32
    %c0_i32_1 = arith.constant 0 : i32
    return %c0_i32, %c0_i32_0 : i32, i32
  }
  func.func @transform_6(%arg0: i32) -> (i32, i32) {
    %c0_i32 = arith.constant 0 : i32
    %c0_i32_0 = arith.constant 0 : i32
    %c0_i32_1 = arith.constant 0 : i32
    return %c0_i32, %c0_i32_0 : i32, i32
  }
  func.func @transform_7(%arg0: i32) -> (i32, i32) {
    %c0_i32 = arith.constant 0 : i32
    %c0_i32_0 = arith.constant 0 : i32
    %c0_i32_1 = arith.constant 0 : i32
    return %c0_i32, %c0_i32_0 : i32, i32
  }
  func.func @transform_8(%arg0: i32) -> (i32, i32) {
    %c0_i32 = arith.constant 0 : i32
    %c0_i32_0 = arith.constant 0 : i32
    %c0_i32_1 = arith.constant 0 : i32
    return %c0_i32, %c0_i32_0 : i32, i32
  }
  func.func @transform_9(%arg0: i32) -> (i32, i32) {
    %c0_i32 = arith.constant 0 : i32
    %c0_i32_0 = arith.constant 0 : i32
    %c0_i32_1 = arith.constant 0 : i32
    return %c0_i32, %c0_i32_0 : i32, i32
  }
  func.func @transform_10(%arg0: i32) -> (i32, i32) {
    %c0_i32 = arith.constant 0 : i32
    %c0_i32_0 = arith.constant 0 : i32
    %c0_i32_1 = arith.constant 0 : i32
    return %c0_i32, %c0_i32_0 : i32, i32
  }
  func.func @transform_11(%arg0: i32) -> (i32, i32) {
    %c0_i32 = arith.constant 0 : i32
    %c0_i32_0 = arith.constant 0 : i32
    %c0_i32_1 = arith.constant 0 : i32
    return %c0_i32, %c0_i32_0 : i32, i32
  }
  func.func @transform_12(%arg0: i32) -> (i32, i32, i32) {
    %c0_i32 = arith.constant 0 : i32
    %c0_i32_0 = arith.constant 0 : i32
    %c0_i32_1 = arith.constant 0 : i32
    return %arg0, %c0_i32, %c0_i32_0 : i32, i32, i32
  }
}

</mosaic_0001>

<llo_original>
// kernel: tpu_custom_call.1
$region0: #{tpu_custom_call.1}
  #allocation0 [shape = 'u32[]', space=smem, size = 0x4, offset = 0x4, fixed_abs, tag = 'smem constant byte address 0x4 - core index']
  #allocation1 [shape = 'u32[144,128]{1,0:T(1,128)}', space=vmem, size = 0x12000, scoped, tag = 'internal scratch']
  %s0 = inlined_call_operand.vmem [shape: f32[2,8,32], index: 0, kind: input, shape index: {}]
  %s1 = inlined_call_operand.vmem [shape: f32[1,32], index: 1, kind: input, shape index: {}]
  %s2 = inlined_call_operand.vmem [shape: f32[1,32], index: 2, kind: input, shape index: {}]
  %s3 = inlined_call_operand.vmem [shape: f32[32,96], index: 3, kind: input, shape index: {}]
  %s4 = inlined_call_operand.vmem [shape: f32[32,32], index: 4, kind: input, shape index: {}]
  %s5 = inlined_call_operand.vmem [shape: f32[1,32], index: 5, kind: input, shape index: {}]
  %s6 = inlined_call_operand.vmem [shape: f32[1,32], index: 6, kind: input, shape index: {}]
  %s7 = inlined_call_operand.vmem [shape: f32[1,32], index: 7, kind: input, shape index: {}]
  %s8 = inlined_call_operand.vmem [shape: f32[32,128], index: 8, kind: input, shape index: {}]
  %s9 = inlined_call_operand.vmem [shape: f32[1,128], index: 9, kind: input, shape index: {}]
  %s10 = inlined_call_operand.vmem [shape: f32[128,32], index: 10, kind: input, shape index: {}]
  %s11 = inlined_call_operand.vmem [shape: f32[1,32], index: 11, kind: input, shape index: {}]
  %s12 = inlined_call_operand.hbm [shape: f32[2,8,32], index: 12, kind: output, shape index: {}]
  %s13 = sld [smem:[#allocation0]]
  $region58: #{tpu_custom_call.1} parent=0
    _
  %s15 = ssub.s32 1, %s13
  %s16 = scalar_select 0, %s15, %s13
  $region1: #{tpu_custom_call.1} parent=0
    #allocation2 [shape = 'u8[8192]{0}', space=vmem, size = 0x2000, scoped, tag = 'output window, operand 0, single buffered']
    #allocation3 [shape = 's32[1]{0}', space=sflag, size = 0x4, scoped, tag = 'scoped memory for tpu_custom_call.1']
    %17 = vsyncpa [#allocation3], 0
    // Predicated region
    $region2: #{tpu_custom_call.1} parent=1 // pred_check
      _
    $region3: #{tpu_custom_call.1} parent=1 // pred_check_branch
      %19 = sbr.rel (0) target = $region5
    $region4: #{tpu_custom_call.1} parent=1 // pred_region
      _
    $region5: #{tpu_custom_call.1} parent=1 // pred_fallthru
      _
    // Predicated region
    $region6: #{tpu_custom_call.1} parent=1 // pred_check
      _
    $region7: #{tpu_custom_call.1} parent=1 // pred_check_branch
      %21 = sbr.rel (0) target = $region9
    $region8: #{tpu_custom_call.1} parent=1 // pred_region
      _
    $region9: #{tpu_custom_call.1} parent=1 // pred_fallthru
      _
    // Predicated region
    $region10: #{tpu_custom_call.1} parent=1 // pred_check
      _
    $region11: #{tpu_custom_call.1} parent=1 // pred_check_branch
      %23 = sbr.rel (0) target = $region13
    $region12: #{tpu_custom_call.1} parent=1 // pred_region
      _
    $region13: #{tpu_custom_call.1} parent=1 // pred_fallthru
      _
    // Predicated region
    $region14: #{tpu_custom_call.1} parent=1 // pred_check
      _
    $region15: #{tpu_custom_call.1} parent=1 // pred_check_branch
      %25 = sbr.rel (0) target = $region17
    $region16: #{tpu_custom_call.1} parent=1 // pred_region
      _
    $region17: #{tpu_custom_call.1} parent=1 // pred_fallthru
      _
    // Predicated region
    $region18: #{tpu_custom_call.1} parent=1 // pred_check
      _
    $region19: #{tpu_custom_call.1} parent=1 // pred_check_branch
      %27 = sbr.rel (0) target = $region21
    $region20: #{tpu_custom_call.1} parent=1 // pred_region
      _
    $region21: #{tpu_custom_call.1} parent=1 // pred_fallthru
      _
    // Predicated region
    $region22: #{tpu_custom_call.1} parent=1 // pred_check
      _
    $region23: #{tpu_custom_call.1} parent=1 // pred_check_branch
      %29 = sbr.rel (0) target = $region25
    $region24: #{tpu_custom_call.1} parent=1 // pred_region
      _
    $region25: #{tpu_custom_call.1} parent=1 // pred_fallthru
      _
    // Predicated region
    $region26: #{tpu_custom_call.1} parent=1 // pred_check
      _
    $region27: #{tpu_custom_call.1} parent=1 // pred_check_branch
      %31 = sbr.rel (0) target = $region29
    $region28: #{tpu_custom_call.1} parent=1 // pred_region
      _
    $region29: #{tpu_custom_call.1} parent=1 // pred_fallthru
      _
    // Predicated region
    $region30: #{tpu_custom_call.1} parent=1 // pred_check
      _
    $region31: #{tpu_custom_call.1} parent=1 // pred_check_branch
      %33 = sbr.rel (0) target = $region33
    $region32: #{tpu_custom_call.1} parent=1 // pred_region
      _
    $region33: #{tpu_custom_call.1} parent=1 // pred_fallthru
      _
    // Predicated region
    $region34: #{tpu_custom_call.1} parent=1 // pred_check
      _
    $region35: #{tpu_custom_call.1} parent=1 // pred_check_branch
      %35 = sbr.rel (0) target = $region37
    $region36: #{tpu_custom_call.1} parent=1 // pred_region
      _
    $region37: #{tpu_custom_call.1} parent=1 // pred_fallthru
      _
    // Predicated region
    $region38: #{tpu_custom_call.1} parent=1 // pred_check
      _
    $region39: #{tpu_custom_call.1} parent=1 // pred_check_branch
      %37 = sbr.rel (0) target = $region41
    $region40: #{tpu_custom_call.1} parent=1 // pred_region
      _
    $region41: #{tpu_custom_call.1} parent=1 // pred_fallthru
      _
    // Predicated region
    $region42: #{tpu_custom_call.1} parent=1 // pred_check
      _
    $region43: #{tpu_custom_call.1} parent=1 // pred_check_branch
      %39 = sbr.rel (0) target = $region45
    $region44: #{tpu_custom_call.1} parent=1 // pred_region
      _
    $region45: #{tpu_custom_call.1} parent=1 // pred_fallthru
      _
    // Predicated region
    $region46: #{tpu_custom_call.1} parent=1 // pred_check
      _
    $region47: #{tpu_custom_call.1} parent=1 // pred_check_branch
      %41 = sbr.rel (0) target = $region49
    $region48: #{tpu_custom_call.1} parent=1 // pred_region
      _
    $region49: #{tpu_custom_call.1} parent=1 // pred_fallthru
      _
    %v42 = vld [vmem:[%s0] sm:$0xff]
    %v43 = vld [vmem:[%s0 + $0x8] sm:$0xff]
    %v44 = vld [vmem:[%s1] sm:$0x1]
    %v45 = vld [vmem:[%s2] sm:$0x1]
    %vm46 = vcmask 261120
    %v47 = vsel %vm46, %v42, 0.0
    %48 = vadd.xlane.f32.xlu0 %v47
    %v49 = vpop.xlane.xlu0 %48
    %v50 = vsel %vm46, %v43, 0.0
    %51 = vadd.xlane.f32.xlu0 %v50
    %v52 = vpop.xlane.xlu0 %51
    %v53 = vrcp.pop 32.0
    %v54 = vmul.f32 %v49, %v53
    %v55 = vmul.f32 %v52, %v53
    %v56 = vsub.f32 %v42, %v54
    %v57 = vsub.f32 %v43, %v55
    %v58 = vmul.f32 %v56, %v56
    %v59 = vmul.f32 %v57, %v57
    %v60 = vsel %vm46, %v58, 0.0
    %61 = vadd.xlane.f32.xlu0 %v60
    %v62 = vpop.xlane.xlu0 %61
    %v63 = vsel %vm46, %v59, 0.0
    %64 = vadd.xlane.f32.xlu0 %v63
    %v65 = vpop.xlane.xlu0 %64
    %v66 = vmul.f32 %v62, %v53
    %v67 = vmul.f32 %v65, %v53
    %v68 = vadd.f32 %v66, 1e-05
    %v69 = vadd.f32 %v67, 1e-05
    %v70 = vrsqrt.pop %v68
    %v71 = vrsqrt.pop %v69
    %v72 = vmul.f32 %v56, %v70
    %v73 = vmul.f32 %v57, %v71
    %v75 = vlaneseq
    %v76 = vshrl.u32 %v75, 7
    %v77 = vsub.s32 0, %v76
    %v78 = vrot.slane %v44, %v77
    %v80 = vmul.f32 %v72, %v78
    %v81 = vmul.f32 %v73, %v78
    %v83 = vlaneseq
    %v84 = vshrl.u32 %v83, 7
    %v85 = vsub.s32 0, %v84
    %v86 = vrot.slane %v45, %v85
    %v88 = vadd.f32 %v80, %v86
    %v89 = vadd.f32 %v81, %v86
    %v90 = vld [vmem:[%s3] sm:$0xff]
    %v91 = vld [vmem:[%s3 + $0x8] sm:$0xff]
    %v92 = vld [vmem:[%s3 + $0x10] sm:$0xff]
    %v93 = vld [vmem:[%s3 + $0x18] sm:$0xff]
    %v95 = vsel %vm46, %v88, 0
    %v98 = vsel %vm46, %v89, 0
    %100 = vmatprep.subr.mxu0 0.0
    %101 = vmatpush1.msra.mxu0 %v90
    %102 = vmatprep.subr.mxu0 0.0
    %103 = vmatpush1.msra.mxu0 %v91
    %104 = vmatprep.subr.mxu0 0.0
    %105 = vmatpush1.msra.mxu0 %v92
    %106 = vmatprep.subr.mxu0 0.0
    %107 = vmatpush1.msra.mxu0 %v93
    %108 = vmatprep.subr.mxu0 0.0
    %109 = vmatpush1.msra.mxu0 0.0
    %110 = vmatprep.subr.mxu0 0.0
    %111 = vmatpush1.msra.mxu0 0.0
    %112 = vmatprep.subr.mxu0 0.0
    %113 = vmatpush1.msra.mxu0 0.0
    %114 = vmatprep.subr.mxu0 0.0
    %115 = vmatpush1.msra.mxu0 0.0
    %116 = vmatprep.subr.mxu0 0.0
    %117 = vmatpush1.msra.mxu0 0.0
    %118 = vmatprep.subr.mxu0 0.0
    %119 = vmatpush1.msra.mxu0 0.0
    %120 = vmatprep.subr.mxu0 0.0
    %121 = vmatpush1.msra.mxu0 0.0
    %122 = vmatprep.subr.mxu0 0.0
    %123 = vmatpush1.msra.mxu0 0.0
    %124 = vmatprep.subr.mxu0 0.0
    %125 = vmatpush1.msra.mxu0 0.0
    %126 = vmatprep.subr.mxu0 0.0
    %127 = vmatpush1.msra.mxu0 0.0
    %128 = vmatprep.subr.mxu0 0.0
    %129 = vmatpush1.msra.mxu0 0.0
    %130 = vmatprep.subr.mxu0 0.0
    %131 = vmatpush1.msra.mxu0 0.0
    %132 = vmatprep.subr.mxu0 0.0
    %133 = vmatpush1.msra.mxu0 0.0
    %134 = vmatprep.subr.mxu0 0.0
    %135 = vmatpush1.msra.mxu0 0.0
    %136 = vmatprep.subr.mxu0 0.0
    %137 = vmatpush1.msra.mxu0 0.0
    %138 = vmatprep.subr.mxu0 0.0
    %139 = vmatpush1.msra.mxu0 0.0
    %140 = vmatprep.subr.mxu0 0.0
    %141 = vmatpush1.msra.mxu0 0.0
    %142 = vmatprep.subr.mxu0 0.0
    %143 = vmatpush1.msra.mxu0 0.0
    %144 = vmatprep.subr.mxu0 0.0
    %145 = vmatpush1.msra.mxu0 0.0
    %146 = vmatprep.subr.mxu0 0.0
    %147 = vmatpush1.msra.mxu0 0.0
    %148 = vmatprep.subr.mxu0 0.0
    %149 = vmatpush1.msra.mxu0 0.0
    %150 = vmatprep.subr.mxu0 0.0
    %151 = vmatpush1.msra.mxu0 0.0
    %152 = vmatprep.subr.mxu0 0.0
    %153 = vmatpush1.msra.mxu0 0.0
    %154 = vmatprep.subr.mxu0 0.0
    %155 = vmatpush1.msra.mxu0 0.0
    %156 = vmatprep.subr.mxu0 0.0
    %157 = vmatpush1.msra.mxu0 0.0
    %158 = vmatprep.subr.mxu0 0.0
    %159 = vmatpush1.msra.mxu0 0.0
    %160 = vmatprep.subr.mxu0 0.0
    %161 = vmatpush1.msra.mxu0 0.0
    %162 = vmatprep.subr.mxu0 0.0
    %163 = vmatpush1.msra.mxu0 0.0
    %164 = vmatprep.mubr.f32.mxu0 0.0
    %165 = vmatmul.mubr.f32.gmra.mrb[0].mxu0 %v95
    %v166 = vpop.f32.mrb[0].mxu0
    %v167 = vadd.f32 0.0, %v166
    %v168 = vpop.f32.mrb[0].mxu0
    %169 = vmatprep.mubr.f32.mxu0 0.0
    %170 = vmatmul.mubr.f32.gmra.mrb[0].mxu0 %v98
    %v171 = vpop.f32.mrb[0].mxu0
    %v172 = vadd.f32 0.0, %v171
    %v173 = vpop.f32.mrb[0].mxu0
    %174 = vdwg.mxu0
    %177 = vrot.lane.b32.xlu0 %v167, 120
    %v178 = vpop.permute.xlu0 %177
    %179 = vrot.lane.b32.xlu0 %v172, 120
    %v180 = vpop.permute.xlu0 %179
    %181 = vrot.lane.b32.xlu0 %v167, 112
    %v182 = vpop.permute.xlu0 %181
    %183 = vrot.lane.b32.xlu0 %v172, 112
    %v184 = vpop.permute.xlu0 %183
    %185 = vrot.lane.b32.xlu0 %v167, 104
    %v186 = vpop.permute.xlu0 %185
    %187 = vrot.lane.b32.xlu0 %v172, 104
    %v188 = vpop.permute.xlu0 %187
    %189 = vrot.lane.b32.xlu0 %v167, 96
    %v190 = vpop.permute.xlu0 %189
    %vm191 = vcmask 64512
    %v192 = vsel %vm191, %v167, 0
    %v194 = vsel %vm191, %v190, 0
    %196 = vmatprep.subr.mxu0 0.0
    %197 = vmatpush1.xpose.msra.mxu0 %v194
    %198 = vmatprep.subr.mxu0 0.0
    %199 = vmatpush1.xpose.msra.mxu0 0.0
    %200 = vmatprep.subr.mxu0 0.0
    %201 = vmatpush1.xpose.msra.mxu0 0.0
    %202 = vmatprep.subr.mxu0 0.0
    %203 = vmatpush1.xpose.msra.mxu0 0.0
    %204 = vmatprep.subr.mxu0 0.0
    %205 = vmatpush1.xpose.msra.mxu0 0.0
    %206 = vmatprep.subr.mxu0 0.0
    %207 = vmatpush1.xpose.msra.mxu0 0.0
    %208 = vmatprep.subr.mxu0 0.0
    %209 = vmatpush1.xpose.msra.mxu0 0.0
    %210 = vmatprep.subr.mxu0 0.0
    %211 = vmatpush1.xpose.msra.mxu0 0.0
    %212 = vmatprep.subr.mxu0 0.0
    %213 = vmatpush1.xpose.msra.mxu0 0.0
    %214 = vmatprep.subr.mxu0 0.0
    %215 = vmatpush1.xpose.msra.mxu0 0.0
    %216 = vmatprep.subr.mxu0 0.0
    %217 = vmatpush1.xpose.msra.mxu0 0.0
    %218 = vmatprep.subr.mxu0 0.0
    %219 = vmatpush1.xpose.msra.mxu0 0.0
    %220 = vmatprep.subr.mxu0 0.0
    %221 = vmatpush1.xpose.msra.mxu0 0.0
    %222 = vmatprep.subr.mxu0 0.0
    %223 = vmatpush1.xpose.msra.mxu0 0.0
    %224 = vmatprep.subr.mxu0 0.0
    %225 = vmatpush1.xpose.msra.mxu0 0.0
    %226 = vmatprep.subr.mxu0 0.0
    %227 = vmatpush1.xpose.msra.mxu0 0.0
    %228 = vmatprep.subr.mxu0 0.0
    %229 = vmatpush1.xpose.msra.mxu0 0.0
    %230 = vmatprep.subr.mxu0 0.0
    %231 = vmatpush1.xpose.msra.mxu0 0.0
    %232 = vmatprep.subr.mxu0 0.0
    %233 = vmatpush1.xpose.msra.mxu0 0.0
    %234 = vmatprep.subr.mxu0 0.0
    %235 = vmatpush1.xpose.msra.mxu0 0.0
    %236 = vmatprep.subr.mxu0 0.0
    %237 = vmatpush1.xpose.msra.mxu0 0.0
    %238 = vmatprep.subr.mxu0 0.0
    %239 = vmatpush1.xpose.msra.mxu0 0.0
    %240 = vmatprep.subr.mxu0 0.0
    %241 = vmatpush1.xpose.msra.mxu0 0.0
    %242 = vmatprep.subr.mxu0 0.0
    %243 = vmatpush1.xpose.msra.mxu0 0.0
    %244 = vmatprep.subr.mxu0 0.0
    %245 = vmatpush1.xpose.msra.mxu0 0.0
    %246 = vmatprep.subr.mxu0 0.0
    %247 = vmatpush1.xpose.msra.mxu0 0.0
    %248 = vmatprep.subr.mxu0 0.0
    %249 = vmatpush1.xpose.msra.mxu0 0.0
    %250 = vmatprep.subr.mxu0 0.0
    %251 = vmatpush1.xpose.msra.mxu0 0.0
    %252 = vmatprep.subr.mxu0 0.0
    %253 = vmatpush1.xpose.msra.mxu0 0.0
    %254 = vmatprep.subr.mxu0 0.0
    %255 = vmatpush1.xpose.msra.mxu0 0.0
    %256 = vmatprep.subr.mxu0 0.0
    %257 = vmatpush1.xpose.msra.mxu0 0.0
    %258 = vmatprep.subr.mxu0 0.0
    %259 = vmatpush1.xpose.msra.mxu0 0.0
    %260 = vmatprep.mubr.f32.mxu0 0.0
    %261 = vmatmul.mubr.f32.gmra.mrb[0].mxu0 %v192
    %v262 = vpop.f32.mrb[0].mxu0
    %v263 = vadd.f32 0.0, %v262
    %v264 = vpop.f32.mrb[0].mxu0
    %265 = vdwg.mxu0
    %266 = vrot.lane.b32.xlu0 %v172, 96
    %v267 = vpop.permute.xlu0 %266
    %v268 = vsel %vm191, %v172, 0
    %v270 = vsel %vm191, %v267, 0
    %272 = vmatprep.subr.mxu0 0.0
    %273 = vmatpush1.xpose.msra.mxu0 %v270
    %274 = vmatprep.subr.mxu0 0.0
    %275 = vmatpush1.xpose.msra.mxu0 0.0
    %276 = vmatprep.subr.mxu0 0.0
    %277 = vmatpush1.xpose.msra.mxu0 0.0
    %278 = vmatprep.subr.mxu0 0.0
    %279 = vmatpush1.xpose.msra.mxu0 0.0
    %280 = vmatprep.subr.mxu0 0.0
    %281 = vmatpush1.xpose.msra.mxu0 0.0
    %282 = vmatprep.subr.mxu0 0.0
    %283 = vmatpush1.xpose.msra.mxu0 0.0
    %284 = vmatprep.subr.mxu0 0.0
    %285 = vmatpush1.xpose.msra.mxu0 0.0
    %286 = vmatprep.subr.mxu0 0.0
    %287 = vmatpush1.xpose.msra.mxu0 0.0
    %288 = vmatprep.subr.mxu0 0.0
    %289 = vmatpush1.xpose.msra.mxu0 0.0
    %290 = vmatprep.subr.mxu0 0.0
    %291 = vmatpush1.xpose.msra.mxu0 0.0
    %292 = vmatprep.subr.mxu0 0.0
    %293 = vmatpush1.xpose.msra.mxu0 0.0
    %294 = vmatprep.subr.mxu0 0.0
    %295 = vmatpush1.xpose.msra.mxu0 0.0
    %296 = vmatprep.subr.mxu0 0.0
    %297 = vmatpush1.xpose.msra.mxu0 0.0
    %298 = vmatprep.subr.mxu0 0.0
    %299 = vmatpush1.xpose.msra.mxu0 0.0
    %300 = vmatprep.subr.mxu0 0.0
    %301 = vmatpush1.xpose.msra.mxu0 0.0
    %302 = vmatprep.subr.mxu0 0.0
    %303 = vmatpush1.xpose.msra.mxu0 0.0
    %304 = vmatprep.subr.mxu0 0.0
    %305 = vmatpush1.xpose.msra.mxu0 0.0
    %306 = vmatprep.subr.mxu0 0.0
    %307 = vmatpush1.xpose.msra.mxu0 0.0
    %308 = vmatprep.subr.mxu0 0.0
    %309 = vmatpush1.xpose.msra.mxu0 0.0
    %310 = vmatprep.subr.mxu0 0.0
    %311 = vmatpush1.xpose.msra.mxu0 0.0
    %312 = vmatprep.subr.mxu0 0.0
    %313 = vmatpush1.xpose.msra.mxu0 0.0
    %314 = vmatprep.subr.mxu0 0.0
    %315 = vmatpush1.xpose.msra.mxu0 0.0
    %316 = vmatprep.subr.mxu0 0.0
    %317 = vmatpush1.xpose.msra.mxu0 0.0
    %318 = vmatprep.subr.mxu0 0.0
    %319 = vmatpush1.xpose.msra.mxu0 0.0
    %320 = vmatprep.subr.mxu0 0.0
    %321 = vmatpush1.xpose.msra.mxu0 0.0
    %322 = vmatprep.subr.mxu0 0.0
    %323 = vmatpush1.xpose.msra.mxu0 0.0
    %324 = vmatprep.subr.mxu0 0.0
    %325 = vmatpush1.xpose.msra.mxu0 0.0
    %326 = vmatprep.subr.mxu0 0.0
    %327 = vmatpush1.xpose.msra.mxu0 0.0
    %328 = vmatprep.subr.mxu0 0.0
    %329 = vmatpush1.xpose.msra.mxu0 0.0
    %330 = vmatprep.subr.mxu0 0.0
    %331 = vmatpush1.xpose.msra.mxu0 0.0
    %332 = vmatprep.subr.mxu0 0.0
    %333 = vmatpush1.xpose.msra.mxu0 0.0
    %334 = vmatprep.subr.mxu0 0.0
    %335 = vmatpush1.xpose.msra.mxu0 0.0
    %336 = vmatprep.mubr.f32.mxu0 0.0
    %337 = vmatmul.mubr.f32.gmra.mrb[0].mxu0 %v268
    %v338 = vpop.f32.mrb[0].mxu0
    %v339 = vadd.f32 0.0, %v338
    %v340 = vpop.f32.mrb[0].mxu0
    %341 = vdwg.mxu0
    %342 = vrot.lane.b32.xlu0 %v178, 96
    %v343 = vpop.permute.xlu0 %342
    %v344 = vsel %vm191, %v178, 0
    %v346 = vsel %vm191, %v343, 0
    %348 = vmatprep.subr.mxu0 0.0
    %349 = vmatpush1.xpose.msra.mxu0 %v346
    %350 = vmatprep.subr.mxu0 0.0
    %351 = vmatpush1.xpose.msra.mxu0 0.0
    %352 = vmatprep.subr.mxu0 0.0
    %353 = vmatpush1.xpose.msra.mxu0 0.0
    %354 = vmatprep.subr.mxu0 0.0
    %355 = vmatpush1.xpose.msra.mxu0 0.0
    %356 = vmatprep.subr.mxu0 0.0
    %357 = vmatpush1.xpose.msra.mxu0 0.0
    %358 = vmatprep.subr.mxu0 0.0
    %359 = vmatpush1.xpose.msra.mxu0 0.0
    %360 = vmatprep.subr.mxu0 0.0
    %361 = vmatpush1.xpose.msra.mxu0 0.0
    %362 = vmatprep.subr.mxu0 0.0
    %363 = vmatpush1.xpose.msra.mxu0 0.0
    %364 = vmatprep.subr.mxu0 0.0
    %365 = vmatpush1.xpose.msra.mxu0 0.0
    %366 = vmatprep.subr.mxu0 0.0
    %367 = vmatpush1.xpose.msra.mxu0 0.0
    %368 = vmatprep.subr.mxu0 0.0
    %369 = vmatpush1.xpose.msra.mxu0 0.0
    %370 = vmatprep.subr.mxu0 0.0
    %371 = vmatpush1.xpose.msra.mxu0 0.0
    %372 = vmatprep.subr.mxu0 0.0
    %373 = vmatpush1.xpose.msra.mxu0 0.0
    %374 = vmatprep.subr.mxu0 0.0
    %375 = vmatpush1.xpose.msra.mxu0 0.0
    %376 = vmatprep.subr.mxu0 0.0
    %377 = vmatpush1.xpose.msra.mxu0 0.0
    %378 = vmatprep.subr.mxu0 0.0
    %379 = vmatpush1.xpose.msra.mxu0 0.0
    %380 = vmatprep.subr.mxu0 0.0
    %381 = vmatpush1.xpose.msra.mxu0 0.0
    %382 = vmatprep.subr.mxu0 0.0
    %383 = vmatpush1.xpose.msra.mxu0 0.0
    %384 = vmatprep.subr.mxu0 0.0
    %385 = vmatpush1.xpose.msra.mxu0 0.0
    %386 = vmatprep.subr.mxu0 0.0
    %387 = vmatpush1.xpose.msra.mxu0 0.0
    %388 = vmatprep.subr.mxu0 0.0
    %389 = vmatpush1.xpose.msra.mxu0 0.0
    %390 = vmatprep.subr.mxu0 0.0
    %391 = vmatpush1.xpose.msra.mxu0 0.0
    %392 = vmatprep.subr.mxu0 0.0
    %393 = vmatpush1.xpose.msra.mxu0 0.0
    %394 = vmatprep.subr.mxu0 0.0
    %395 = vmatpush1.xpose.msra.mxu0 0.0
    %396 = vmatprep.subr.mxu0 0.0
    %397 = vmatpush1.xpose.msra.mxu0 0.0
    %398 = vmatprep.subr.mxu0 0.0
    %399 = vmatpush1.xpose.msra.mxu0 0.0
    %400 = vmatprep.subr.mxu0 0.0
    %401 = vmatpush1.xpose.msra.mxu0 0.0
    %402 = vmatprep.subr.mxu0 0.0
    %403 = vmatpush1.xpose.msra.mxu0 0.0
    %404 = vmatprep.subr.mxu0 0.0
    %405 = vmatpush1.xpose.msra.mxu0 0.0
    %406 = vmatprep.subr.mxu0 0.0
    %407 = vmatpush1.xpose.msra.mxu0 0.0
    %408 = vmatprep.subr.mxu0 0.0
    %409 = vmatpush1.xpose.msra.mxu0 0.0
    %410 = vmatprep.subr.mxu0 0.0
    %411 = vmatpush1.xpose.msra.mxu0 0.0
    %412 = vmatprep.mubr.f32.mxu0 0.0
    %413 = vmatmul.mubr.f32.gmra.mrb[0].mxu0 %v344
    %v414 = vpop.f32.mrb[0].mxu0
    %v415 = vadd.f32 0.0, %v414
    %v416 = vpop.f32.mrb[0].mxu0
    %417 = vdwg.mxu0
    %418 = vrot.lane.b32.xlu0 %v180, 96
    %v419 = vpop.permute.xlu0 %418
    %v420 = vsel %vm191, %v180, 0
    %v422 = vsel %vm191, %v419, 0
    %424 = vmatprep.subr.mxu0 0.0
    %425 = vmatpush1.xpose.msra.mxu0 %v422
    %426 = vmatprep.subr.mxu0 0.0
    %427 = vmatpush1.xpose.msra.mxu0 0.0
    %428 = vmatprep.subr.mxu0 0.0
    %429 = vmatpush1.xpose.msra.mxu0 0.0
    %430 = vmatprep.subr.mxu0 0.0
    %431 = vmatpush1.xpose.msra.mxu0 0.0
    %432 = vmatprep.subr.mxu0 0.0
    %433 = vmatpush1.xpose.msra.mxu0 0.0
    %434 = vmatprep.subr.mxu0 0.0
    %435 = vmatpush1.xpose.msra.mxu0 0.0
    %436 = vmatprep.subr.mxu0 0.0
    %437 = vmatpush1.xpose.msra.mxu0 0.0
    %438 = vmatprep.subr.mxu0 0.0
    %439 = vmatpush1.xpose.msra.mxu0 0.0
    %440 = vmatprep.subr.mxu0 0.0
    %441 = vmatpush1.xpose.msra.mxu0 0.0
    %442 = vmatprep.subr.mxu0 0.0
    %443 = vmatpush1.xpose.msra.mxu0 0.0
    %444 = vmatprep.subr.mxu0 0.0
    %445 = vmatpush1.xpose.msra.mxu0 0.0
    %446 = vmatprep.subr.mxu0 0.0
    %447 = vmatpush1.xpose.msra.mxu0 0.0
    %448 = vmatprep.subr.mxu0 0.0
    %449 = vmatpush1.xpose.msra.mxu0 0.0
    %450 = vmatprep.subr.mxu0 0.0
    %451 = vmatpush1.xpose.msra.mxu0 0.0
    %452 = vmatprep.subr.mxu0 0.0
    %453 = vmatpush1.xpose.msra.mxu0 0.0
    %454 = vmatprep.subr.mxu0 0.0
    %455 = vmatpush1.xpose.msra.mxu0 0.0
    %456 = vmatprep.subr.mxu0 0.0
    %457 = vmatpush1.xpose.msra.mxu0 0.0
    %458 = vmatprep.subr.mxu0 0.0
    %459 = vmatpush1.xpose.msra.mxu0 0.0
    %460 = vmatprep.subr.mxu0 0.0
    %461 = vmatpush1.xpose.msra.mxu0 0.0
    %462 = vmatprep.subr.mxu0 0.0
    %463 = vmatpush1.xpose.msra.mxu0 0.0
    %464 = vmatprep.subr.mxu0 0.0
    %465 = vmatpush1.xpose.msra.mxu0 0.0
    %466 = vmatprep.subr.mxu0 0.0
    %467 = vmatpush1.xpose.msra.mxu0 0.0
    %468 = vmatprep.subr.mxu0 0.0
    %469 = vmatpush1.xpose.msra.mxu0 0.0
    %470 = vmatprep.subr.mxu0 0.0
    %471 = vmatpush1.xpose.msra.mxu0 0.0
    %472 = vmatprep.subr.mxu0 0.0
    %473 = vmatpush1.xpose.msra.mxu0 0.0
    %474 = vmatprep.subr.mxu0 0.0
    %475 = vmatpush1.xpose.msra.mxu0 0.0
    %476 = vmatprep.subr.mxu0 0.0
    %477 = vmatpush1.xpose.msra.mxu0 0.0
    %478 = vmatprep.subr.mxu0 0.0
    %479 = vmatpush1.xpose.msra.mxu0 0.0
    %480 = vmatprep.subr.mxu0 0.0
    %481 = vmatpush1.xpose.msra.mxu0 0.0
    %482 = vmatprep.subr.mxu0 0.0
    %483 = vmatpush1.xpose.msra.mxu0 0.0
    %484 = vmatprep.subr.mxu0 0.0
    %485 = vmatpush1.xpose.msra.mxu0 0.0
    %486 = vmatprep.subr.mxu0 0.0
    %487 = vmatpush1.xpose.msra.mxu0 0.0
    %488 = vmatprep.mubr.f32.mxu0 0.0
    %489 = vmatmul.mubr.f32.gmra.mrb[0].mxu0 %v420
    %v490 = vpop.f32.mrb[0].mxu0
    %v491 = vadd.f32 0.0, %v490
    %v492 = vpop.f32.mrb[0].mxu0
    %493 = vdwg.mxu0
    %494 = vrot.lane.b32.xlu0 %v182, 96
    %v495 = vpop.permute.xlu0 %494
    %v496 = vsel %vm191, %v182, 0
    %v498 = vsel %vm191, %v495, 0
    %500 = vmatprep.subr.mxu0 0.0
    %501 = vmatpush1.xpose.msra.mxu0 %v498
    %502 = vmatprep.subr.mxu0 0.0
    %503 = vmatpush1.xpose.msra.mxu0 0.0
    %504 = vmatprep.subr.mxu0 0.0
    %505 = vmatpush1.xpose.msra.mxu0 0.0
    %506 = vmatprep.subr.mxu0 0.0
    %507 = vmatpush1.xpose.msra.mxu0 0.0
    %508 = vmatprep.subr.mxu0 0.0
    %509 = vmatpush1.xpose.msra.mxu0 0.0
    %510 = vmatprep.subr.mxu0 0.0
    %511 = vmatpush1.xpose.msra.mxu0 0.0
    %512 = vmatprep.subr.mxu0 0.0
    %513 = vmatpush1.xpose.msra.mxu0 0.0
    %514 = vmatprep.subr.mxu0 0.0
    %515 = vmatpush1.xpose.msra.mxu0 0.0
    %516 = vmatprep.subr.mxu0 0.0
    %517 = vmatpush1.xpose.msra.mxu0 0.0
    %518 = vmatprep.subr.mxu0 0.0
    %519 = vmatpush1.xpose.msra.mxu0 0.0
    %520 = vmatprep.subr.mxu0 0.0
    %521 = vmatpush1.xpose.msra.mxu0 0.0
    %522 = vmatprep.subr.mxu0 0.0
    %523 = vmatpush1.xpose.msra.mxu0 0.0
    %524 = vmatprep.subr.mxu0 0.0
    %525 = vmatpush1.xpose.msra.mxu0 0.0
    %526 = vmatprep.subr.mxu0 0.0
    %527 = vmatpush1.xpose.msra.mxu0 0.0
    %528 = vmatprep.subr.mxu0 0.0
    %529 = vmatpush1.xpose.msra.mxu0 0.0
    %530 = vmatprep.subr.mxu0 0.0
    %531 = vmatpush1.xpose.msra.mxu0 0.0
    %532 = vmatprep.subr.mxu0 0.0
    %533 = vmatpush1.xpose.msra.mxu0 0.0
    %534 = vmatprep.subr.mxu0 0.0
    %535 = vmatpush1.xpose.msra.mxu0 0.0
    %536 = vmatprep.subr.mxu0 0.0
    %537 = vmatpush1.xpose.msra.mxu0 0.0
    %538 = vmatprep.subr.mxu0 0.0
    %539 = vmatpush1.xpose.msra.mxu0 0.0
    %540 = vmatprep.subr.mxu0 0.0
    %541 = vmatpush1.xpose.msra.mxu0 0.0
    %542 = vmatprep.subr.mxu0 0.0
    %543 = vmatpush1.xpose.msra.mxu0 0.0
    %544 = vmatprep.subr.mxu0 0.0
    %545 = vmatpush1.xpose.msra.mxu0 0.0
    %546 = vmatprep.subr.mxu0 0.0
    %547 = vmatpush1.xpose.msra.mxu0 0.0
    %548 = vmatprep.subr.mxu0 0.0
    %549 = vmatpush1.xpose.msra.mxu0 0.0
    %550 = vmatprep.subr.mxu0 0.0
    %551 = vmatpush1.xpose.msra.mxu0 0.0
    %552 = vmatprep.subr.mxu0 0.0
    %553 = vmatpush1.xpose.msra.mxu0 0.0
    %554 = vmatprep.subr.mxu0 0.0
    %555 = vmatpush1.xpose.msra.mxu0 0.0
    %556 = vmatprep.subr.mxu0 0.0
    %557 = vmatpush1.xpose.msra.mxu0 0.0
    %558 = vmatprep.subr.mxu0 0.0
    %559 = vmatpush1.xpose.msra.mxu0 0.0
    %560 = vmatprep.subr.mxu0 0.0
    %561 = vmatpush1.xpose.msra.mxu0 0.0
    %562 = vmatprep.subr.mxu0 0.0
    %563 = vmatpush1.xpose.msra.mxu0 0.0
    %564 = vmatprep.mubr.f32.mxu0 0.0
    %565 = vmatmul.mubr.f32.gmra.mrb[0].mxu0 %v496
    %v566 = vpop.f32.mrb[0].mxu0
    %v567 = vadd.f32 0.0, %v566
    %v568 = vpop.f32.mrb[0].mxu0
    %569 = vdwg.mxu0
    %570 = vrot.lane.b32.xlu0 %v184, 96
    %v571 = vpop.permute.xlu0 %570
    %v572 = vsel %vm191, %v184, 0
    %v574 = vsel %vm191, %v571, 0
    %576 = vmatprep.subr.mxu0 0.0
    %577 = vmatpush1.xpose.msra.mxu0 %v574
    %578 = vmatprep.subr.mxu0 0.0
    %579 = vmatpush1.xpose.msra.mxu0 0.0
    %580 = vmatprep.subr.mxu0 0.0
    %581 = vmatpush1.xpose.msra.mxu0 0.0
    %582 = vmatprep.subr.mxu0 0.0
    %583 = vmatpush1.xpose.msra.mxu0 0.0
    %584 = vmatprep.subr.mxu0 0.0
    %585 = vmatpush1.xpose.msra.mxu0 0.0
    %586 = vmatprep.subr.mxu0 0.0
    %587 = vmatpush1.xpose.msra.mxu0 0.0
    %588 = vmatprep.subr.mxu0 0.0
    %589 = vmatpush1.xpose.msra.mxu0 0.0
    %590 = vmatprep.subr.mxu0 0.0
    %591 = vmatpush1.xpose.msra.mxu0 0.0
    %592 = vmatprep.subr.mxu0 0.0
    %593 = vmatpush1.xpose.msra.mxu0 0.0
    %594 = vmatprep.subr.mxu0 0.0
    %595 = vmatpush1.xpose.msra.mxu0 0.0
    %596 = vmatprep.subr.mxu0 0.0
    %597 = vmatpush1.xpose.msra.mxu0 0.0
    %598 = vmatprep.subr.mxu0 0.0
    %599 = vmatpush1.xpose.msra.mxu0 0.0
    %600 = vmatprep.subr.mxu0 0.0
    %601 = vmatpush1.xpose.msra.mxu0 0.0
    %602 = vmatprep.subr.mxu0 0.0
    %603 = vmatpush1.xpose.msra.mxu0 0.0
    %604 = vmatprep.subr.mxu0 0.0
    %605 = vmatpush1.xpose.msra.mxu0 0.0
    %606 = vmatprep.subr.mxu0 0.0
    %607 = vmatpush1.xpose.msra.mxu0 0.0
    %608 = vmatprep.subr.mxu0 0.0
    %609 = vmatpush1.xpose.msra.mxu0 0.0
    %610 = vmatprep.subr.mxu0 0.0
    %611 = vmatpush1.xpose.msra.mxu0 0.0
    %612 = vmatprep.subr.mxu0 0.0
    %613 = vmatpush1.xpose.msra.mxu0 0.0
    %614 = vmatprep.subr.mxu0 0.0
    %615 = vmatpush1.xpose.msra.mxu0 0.0
    %616 = vmatprep.subr.mxu0 0.0
    %617 = vmatpush1.xpose.msra.mxu0 0.0
    %618 = vmatprep.subr.mxu0 0.0
    %619 = vmatpush1.xpose.msra.mxu0 0.0
    %620 = vmatprep.subr.mxu0 0.0
    %621 = vmatpush1.xpose.msra.mxu0 0.0
    %622 = vmatprep.subr.mxu0 0.0
    %623 = vmatpush1.xpose.msra.mxu0 0.0
    %624 = vmatprep.subr.mxu0 0.0
    %625 = vmatpush1.xpose.msra.mxu0 0.0
    %626 = vmatprep.subr.mxu0 0.0
    %627 = vmatpush1.xpose.msra.mxu0 0.0
    %628 = vmatprep.subr.mxu0 0.0
    %629 = vmatpush1.xpose.msra.mxu0 0.0
    %630 = vmatprep.subr.mxu0 0.0
    %631 = vmatpush1.xpose.msra.mxu0 0.0
    %632 = vmatprep.subr.mxu0 0.0
    %633 = vmatpush1.xpose.msra.mxu0 0.0
    %634 = vmatprep.subr.mxu0 0.0
    %635 = vmatpush1.xpose.msra.mxu0 0.0
    %636 = vmatprep.subr.mxu0 0.0
    %637 = vmatpush1.xpose.msra.mxu0 0.0
    %638 = vmatprep.subr.mxu0 0.0
    %639 = vmatpush1.xpose.msra.mxu0 0.0
    %640 = vmatprep.mubr.f32.mxu0 0.0
    %641 = vmatmul.mubr.f32.gmra.mrb[0].mxu0 %v572
    %v642 = vpop.f32.mrb[0].mxu0
    %v643 = vadd.f32 0.0, %v642
    %v644 = vpop.f32.mrb[0].mxu0
    %645 = vdwg.mxu0
    %646 = vrot.lane.b32.xlu0 %v186, 96
    %v647 = vpop.permute.xlu0 %646
    %v648 = vsel %vm191, %v186, 0
    %v650 = vsel %vm191, %v647, 0
    %652 = vmatprep.subr.mxu0 0.0
    %653 = vmatpush1.xpose.msra.mxu0 %v650
    %654 = vmatprep.subr.mxu0 0.0
    %655 = vmatpush1.xpose.msra.mxu0 0.0
    %656 = vmatprep.subr.mxu0 0.0
    %657 = vmatpush1.xpose.msra.mxu0 0.0
    %658 = vmatprep.subr.mxu0 0.0
    %659 = vmatpush1.xpose.msra.mxu0 0.0
    %660 = vmatprep.subr.mxu0 0.0
    %661 = vmatpush1.xpose.msra.mxu0 0.0
    %662 = vmatprep.subr.mxu0 0.0
    %663 = vmatpush1.xpose.msra.mxu0 0.0
    %664 = vmatprep.subr.mxu0 0.0
    %665 = vmatpush1.xpose.msra.mxu0 0.0
    %666 = vmatprep.subr.mxu0 0.0
    %667 = vmatpush1.xpose.msra.mxu0 0.0
    %668 = vmatprep.subr.mxu0 0.0
    %669 = vmatpush1.xpose.msra.mxu0 0.0
    %670 = vmatprep.subr.mxu0 0.0
    %671 = vmatpush1.xpose.msra.mxu0 0.0
    %672 = vmatprep.subr.mxu0 0.0
    %673 = vmatpush1.xpose.msra.mxu0 0.0
    %674 = vmatprep.subr.mxu0 0.0
    %675 = vmatpush1.xpose.msra.mxu0 0.0
    %676 = vmatprep.subr.mxu0 0.0
    %677 = vmatpush1.xpose.msra.mxu0 0.0
    %678 = vmatprep.subr.mxu0 0.0
    %679 = vmatpush1.xpose.msra.mxu0 0.0
    %680 = vmatprep.subr.mxu0 0.0
    %681 = vmatpush1.xpose.msra.mxu0 0.0
    %682 = vmatprep.subr.mxu0 0.0
    %683 = vmatpush1.xpose.msra.mxu0 0.0
    %684 = vmatprep.subr.mxu0 0.0
    %685 = vmatpush1.xpose.msra.mxu0 0.0
    %686 = vmatprep.subr.mxu0 0.0
    %687 = vmatpush1.xpose.msra.mxu0 0.0
    %688 = vmatprep.subr.mxu0 0.0
    %689 = vmatpush1.xpose.msra.mxu0 0.0
    %690 = vmatprep.subr.mxu0 0.0
    %691 = vmatpush1.xpose.msra.mxu0 0.0
    %692 = vmatprep.subr.mxu0 0.0
    %693 = vmatpush1.xpose.msra.mxu0 0.0
    %694 = vmatprep.subr.mxu0 0.0
    %695 = vmatpush1.xpose.msra.mxu0 0.0
    %696 = vmatprep.subr.mxu0 0.0
    %697 = vmatpush1.xpose.msra.mxu0 0.0
    %698 = vmatprep.subr.mxu0 0.0
    %699 = vmatpush1.xpose.msra.mxu0 0.0
    %700 = vmatprep.subr.mxu0 0.0
    %701 = vmatpush1.xpose.msra.mxu0 0.0
    %702 = vmatprep.subr.mxu0 0.0
    %703 = vmatpush1.xpose.msra.mxu0 0.0
    %704 = vmatprep.subr.mxu0 0.0
    %705 = vmatpush1.xpose.msra.mxu0 0.0
    %706 = vmatprep.subr.mxu0 0.0
    %707 = vmatpush1.xpose.msra.mxu0 0.0
    %708 = vmatprep.subr.mxu0 0.0
    %709 = vmatpush1.xpose.msra.mxu0 0.0
    %710 = vmatprep.subr.mxu0 0.0
    %711 = vmatpush1.xpose.msra.mxu0 0.0
    %712 = vmatprep.subr.mxu0 0.0
    %713 = vmatpush1.xpose.msra.mxu0 0.0
    %714 = vmatprep.subr.mxu0 0.0
    %715 = vmatpush1.xpose.msra.mxu0 0.0
    %716 = vmatprep.mubr.f32.mxu0 0.0
    %717 = vmatmul.mubr.f32.gmra.mrb[0].mxu0 %v648
    %v718 = vpop.f32.mrb[0].mxu0
    %v719 = vadd.f32 0.0, %v718
    %v720 = vpop.f32.mrb[0].mxu0
    %721 = vdwg.mxu0
    %722 = vrot.lane.b32.xlu0 %v188, 96
    %v723 = vpop.permute.xlu0 %722
    %v724 = vsel %vm191, %v188, 0
    %v726 = vsel %vm191, %v723, 0
    %728 = vmatprep.subr.mxu0 0.0
    %729 = vmatpush1.xpose.msra.mxu0 %v726
    %730 = vmatprep.subr.mxu0 0.0
    %731 = vmatpush1.xpose.msra.mxu0 0.0
    %732 = vmatprep.subr.mxu0 0.0
    %733 = vmatpush1.xpose.msra.mxu0 0.0
    %734 = vmatprep.subr.mxu0 0.0
    %735 = vmatpush1.xpose.msra.mxu0 0.0
    %736 = vmatprep.subr.mxu0 0.0
    %737 = vmatpush1.xpose.msra.mxu0 0.0
    %738 = vmatprep.subr.mxu0 0.0
    %739 = vmatpush1.xpose.msra.mxu0 0.0
    %740 = vmatprep.subr.mxu0 0.0
    %741 = vmatpush1.xpose.msra.mxu0 0.0
    %742 = vmatprep.subr.mxu0 0.0
    %743 = vmatpush1.xpose.msra.mxu0 0.0
    %744 = vmatprep.subr.mxu0 0.0
    %745 = vmatpush1.xpose.msra.mxu0 0.0
    %746 = vmatprep.subr.mxu0 0.0
    %747 = vmatpush1.xpose.msra.mxu0 0.0
    %748 = vmatprep.subr.mxu0 0.0
    %749 = vmatpush1.xpose.msra.mxu0 0.0
    %750 = vmatprep.subr.mxu0 0.0
    %751 = vmatpush1.xpose.msra.mxu0 0.0
    %752 = vmatprep.subr.mxu0 0.0
    %753 = vmatpush1.xpose.msra.mxu0 0.0
    %754 = vmatprep.subr.mxu0 0.0
    %755 = vmatpush1.xpose.msra.mxu0 0.0
    %756 = vmatprep.subr.mxu0 0.0
    %757 = vmatpush1.xpose.msra.mxu0 0.0
    %758 = vmatprep.subr.mxu0 0.0
    %759 = vmatpush1.xpose.msra.mxu0 0.0
    %760 = vmatprep.subr.mxu0 0.0
    %761 = vmatpush1.xpose.msra.mxu0 0.0
    %762 = vmatprep.subr.mxu0 0.0
    %763 = vmatpush1.xpose.msra.mxu0 0.0
    %764 = vmatprep.subr.mxu0 0.0
    %765 = vmatpush1.xpose.msra.mxu0 0.0
    %766 = vmatprep.subr.mxu0 0.0
    %767 = vmatpush1.xpose.msra.mxu0 0.0
    %768 = vmatprep.subr.mxu0 0.0
    %769 = vmatpush1.xpose.msra.mxu0 0.0
    %770 = vmatprep.subr.mxu0 0.0
    %771 = vmatpush1.xpose.msra.mxu0 0.0
    %772 = vmatprep.subr.mxu0 0.0
    %773 = vmatpush1.xpose.msra.mxu0 0.0
    %774 = vmatprep.subr.mxu0 0.0
    %775 = vmatpush1.xpose.msra.mxu0 0.0
    %776 = vmatprep.subr.mxu0 0.0
    %777 = vmatpush1.xpose.msra.mxu0 0.0
    %778 = vmatprep.subr.mxu0 0.0
    %779 = vmatpush1.xpose.msra.mxu0 0.0
    %780 = vmatprep.subr.mxu0 0.0
    %781 = vmatpush1.xpose.msra.mxu0 0.0
    %782 = vmatprep.subr.mxu0 0.0
    %783 = vmatpush1.xpose.msra.mxu0 0.0
    %784 = vmatprep.subr.mxu0 0.0
    %785 = vmatpush1.xpose.msra.mxu0 0.0
    %786 = vmatprep.subr.mxu0 0.0
    %787 = vmatpush1.xpose.msra.mxu0 0.0
    %788 = vmatprep.subr.mxu0 0.0
    %789 = vmatpush1.xpose.msra.mxu0 0.0
    %790 = vmatprep.subr.mxu0 0.0
    %791 = vmatpush1.xpose.msra.mxu0 0.0
    %792 = vmatprep.mubr.f32.mxu0 0.0
    %793 = vmatmul.mubr.f32.gmra.mrb[0].mxu0 %v724
    %v794 = vpop.f32.mrb[0].mxu0
    %v795 = vadd.f32 0.0, %v794
    %v796 = vpop.f32.mrb[0].mxu0
    %797 = vdwg.mxu0
    %v798 = vsel %vm191, %v263, -inf
    %799 = vmax.xlane.f32.xlu0 %v798
    %v800 = vpop.xlane.xlu0 %799
    %v801 = vsel %vm191, %v339, -inf
    %802 = vmax.xlane.f32.xlu0 %v801
    %v803 = vpop.xlane.xlu0 %802
    %v804 = vsel %vm191, %v415, -inf
    %805 = vmax.xlane.f32.xlu0 %v804
    %v806 = vpop.xlane.xlu0 %805
    %v807 = vsel %vm191, %v491, -inf
    %808 = vmax.xlane.f32.xlu0 %v807
    %v809 = vpop.xlane.xlu0 %808
    %v810 = vsel %vm191, %v567, -inf
    %811 = vmax.xlane.f32.xlu0 %v810
    %v812 = vpop.xlane.xlu0 %811
    %v813 = vsel %vm191, %v643, -inf
    %814 = vmax.xlane.f32.xlu0 %v813
    %v815 = vpop.xlane.xlu0 %814
    %v816 = vsel %vm191, %v719, -inf
    %817 = vmax.xlane.f32.xlu0 %v816
    %v818 = vpop.xlane.xlu0 %817
    %v819 = vsel %vm191, %v795, -inf
    %820 = vmax.xlane.f32.xlu0 %v819
    %v821 = vpop.xlane.xlu0 %820
    %v822 = vsub.f32 %v263, %v800
    %v823 = vsub.f32 %v339, %v803
    %v824 = vsub.f32 %v415, %v806
    %v825 = vsub.f32 %v491, %v809
    %v826 = vsub.f32 %v567, %v812
    %v827 = vsub.f32 %v643, %v815
    %v828 = vsub.f32 %v719, %v818
    %v829 = vsub.f32 %v795, %v821
    %v830 = vmul.f32 %v822, 1.442695
    %v831 = vpow.pop %v830
    %v832 = vmul.f32 %v823, 1.442695
    %v833 = vpow.pop %v832
    %v834 = vmul.f32 %v824, 1.442695
    %v835 = vpow.pop %v834
    %v836 = vmul.f32 %v825, 1.442695
    %v837 = vpow.pop %v836
    %v838 = vmul.f32 %v826, 1.442695
    %v839 = vpow.pop %v838
    %v840 = vmul.f32 %v827, 1.442695
    %v841 = vpow.pop %v840
    %v842 = vmul.f32 %v828, 1.442695
    %v843 = vpow.pop %v842
    %v844 = vmul.f32 %v829, 1.442695
    %v845 = vpow.pop %v844
    %v846 = vsel %vm191, %v831, 0.0
    %847 = vadd.xlane.f32.xlu0 %v846
    %v848 = vpop.xlane.xlu0 %847
    %v849 = vsel %vm191, %v833, 0.0
    %850 = vadd.xlane.f32.xlu0 %v849
    %v851 = vpop.xlane.xlu0 %850
    %v852 = vsel %vm191, %v835, 0.0
    %853 = vadd.xlane.f32.xlu0 %v852
    %v854 = vpop.xlane.xlu0 %853
    %v855 = vsel %vm191, %v837, 0.0
    %856 = vadd.xlane.f32.xlu0 %v855
    %v857 = vpop.xlane.xlu0 %856
    %v858 = vsel %vm191, %v839, 0.0
    %859 = vadd.xlane.f32.xlu0 %v858
    %v860 = vpop.xlane.xlu0 %859
    %v861 = vsel %vm191, %v841, 0.0
    %862 = vadd.xlane.f32.xlu0 %v861
    %v863 = vpop.xlane.xlu0 %862
    %v864 = vsel %vm191, %v843, 0.0
    %865 = vadd.xlane.f32.xlu0 %v864
    %v866 = vpop.xlane.xlu0 %865
    %v867 = vsel %vm191, %v845, 0.0
    %868 = vadd.xlane.f32.xlu0 %v867
    %v869 = vpop.xlane.xlu0 %868
    %v870 = vrcp.pop %v848
    %v871 = vrcp.pop %v851
    %v872 = vrcp.pop %v854
    %v873 = vrcp.pop %v857
    %v874 = vrcp.pop %v860
    %v875 = vrcp.pop %v863
    %v876 = vrcp.pop %v866
    %v877 = vrcp.pop %v869
    %v878 = vmul.f32 %v831, %v870
    %v879 = vmul.f32 %v833, %v871
    %v880 = vmul.f32 %v835, %v872
    %v881 = vmul.f32 %v837, %v873
    %v882 = vmul.f32 %v839, %v874
    %v883 = vmul.f32 %v841, %v875
    %v884 = vmul.f32 %v843, %v876
    %v885 = vmul.f32 %v845, %v877
    %886 = vrot.lane.b32.xlu0 %v167, 64
    %v887 = vpop.permute.xlu0 %886
    %v890 = vsel %vm191, %v878, 0
    %892 = vmatprep.subr.mxu0 0.0
    %893 = vmatpush1.msra.mxu0 %v887
    %894 = vmatprep.subr.mxu0 0.0
    %895 = vmatpush1.msra.mxu0 0.0
    %896 = vmatprep.subr.mxu0 0.0
    %897 = vmatpush1.msra.mxu0 0.0
    %898 = vmatprep.subr.mxu0 0.0
    %899 = vmatpush1.msra.mxu0 0.0
    %900 = vmatprep.subr.mxu0 0.0
    %901 = vmatpush1.msra.mxu0 0.0
    %902 = vmatprep.subr.mxu0 0.0
    %903 = vmatpush1.msra.mxu0 0.0
    %904 = vmatprep.subr.mxu0 0.0
    %905 = vmatpush1.msra.mxu0 0.0
    %906 = vmatprep.subr.mxu0 0.0
    %907 = vmatpush1.msra.mxu0 0.0
    %908 = vmatprep.subr.mxu0 0.0
    %909 = vmatpush1.msra.mxu0 0.0
    %910 = vmatprep.subr.mxu0 0.0
    %911 = vmatpush1.msra.mxu0 0.0
    %912 = vmatprep.subr.mxu0 0.0
    %913 = vmatpush1.msra.mxu0 0.0
    %914 = vmatprep.subr.mxu0 0.0
    %915 = vmatpush1.msra.mxu0 0.0
    %916 = vmatprep.subr.mxu0 0.0
    %917 = vmatpush1.msra.mxu0 0.0
    %918 = vmatprep.subr.mxu0 0.0
    %919 = vmatpush1.msra.mxu0 0.0
    %920 = vmatprep.subr.mxu0 0.0
    %921 = vmatpush1.msra.mxu0 0.0
    %922 = vmatprep.subr.mxu0 0.0
    %923 = vmatpush1.msra.mxu0 0.0
    %924 = vmatprep.subr.mxu0 0.0
    %925 = vmatpush1.msra.mxu0 0.0
    %926 = vmatprep.subr.mxu0 0.0
    %927 = vmatpush1.msra.mxu0 0.0
    %928 = vmatprep.subr.mxu0 0.0
    %929 = vmatpush1.msra.mxu0 0.0
    %930 = vmatprep.subr.mxu0 0.0
    %931 = vmatpush1.msra.mxu0 0.0
    %932 = vmatprep.subr.mxu0 0.0
    %933 = vmatpush1.msra.mxu0 0.0
    %934 = vmatprep.subr.mxu0 0.0
    %935 = vmatpush1.msra.mxu0 0.0
    %936 = vmatprep.subr.mxu0 0.0
    %937 = vmatpush1.msra.mxu0 0.0
    %938 = vmatprep.subr.mxu0 0.0
    %939 = vmatpush1.msra.mxu0 0.0
    %940 = vmatprep.subr.mxu0 0.0
    %941 = vmatpush1.msra.mxu0 0.0
    %942 = vmatprep.subr.mxu0 0.0
    %943 = vmatpush1.msra.mxu0 0.0
    %944 = vmatprep.subr.mxu0 0.0
    %945 = vmatpush1.msra.mxu0 0.0
    %946 = vmatprep.subr.mxu0 0.0
    %947 = vmatpush1.msra.mxu0 0.0
    %948 = vmatprep.subr.mxu0 0.0
    %949 = vmatpush1.msra.mxu0 0.0
    %950 = vmatprep.subr.mxu0 0.0
    %951 = vmatpush1.msra.mxu0 0.0
    %952 = vmatprep.subr.mxu0 0.0
    %953 = vmatpush1.msra.mxu0 0.0
    %954 = vmatprep.subr.mxu0 0.0
    %955 = vmatpush1.msra.mxu0 0.0
    %956 = vmatprep.mubr.f32.mxu0 0.0
    %957 = vmatmul.mubr.f32.gmra.mrb[0].mxu0 %v890
    %v958 = vpop.f32.mrb[0].mxu0
    %v959 = vadd.f32 0.0, %v958
    %v960 = vpop.f32.mrb[0].mxu0
    %961 = vdwg.mxu0
    %962 = vrot.lane.b32.xlu0 %v172, 64
    %v963 = vpop.permute.xlu0 %962
    %v966 = vsel %vm191, %v879, 0
    %968 = vmatprep.subr.mxu0 0.0
    %969 = vmatpush1.msra.mxu0 %v963
    %970 = vmatprep.subr.mxu0 0.0
    %971 = vmatpush1.msra.mxu0 0.0
    %972 = vmatprep.subr.mxu0 0.0
    %973 = vmatpush1.msra.mxu0 0.0
    %974 = vmatprep.subr.mxu0 0.0
    %975 = vmatpush1.msra.mxu0 0.0
    %976 = vmatprep.subr.mxu0 0.0
    %977 = vmatpush1.msra.mxu0 0.0
    %978 = vmatprep.subr.mxu0 0.0
    %979 = vmatpush1.msra.mxu0 0.0
    %980 = vmatprep.subr.mxu0 0.0
    %981 = vmatpush1.msra.mxu0 0.0
    %982 = vmatprep.subr.mxu0 0.0
    %983 = vmatpush1.msra.mxu0 0.0
    %984 = vmatprep.subr.mxu0 0.0
    %985 = vmatpush1.msra.mxu0 0.0
    %986 = vmatprep.subr.mxu0 0.0
    %987 = vmatpush1.msra.mxu0 0.0
    %988 = vmatprep.subr.mxu0 0.0
    %989 = vmatpush1.msra.mxu0 0.0
    %990 = vmatprep.subr.mxu0 0.0
    %991 = vmatpush1.msra.mxu0 0.0
    %992 = vmatprep.subr.mxu0 0.0
    %993 = vmatpush1.msra.mxu0 0.0
    %994 = vmatprep.subr.mxu0 0.0
    %995 = vmatpush1.msra.mxu0 0.0
    %996 = vmatprep.subr.mxu0 0.0
    %997 = vmatpush1.msra.mxu0 0.0
    %998 = vmatprep.subr.mxu0 0.0
    %999 = vmatpush1.msra.mxu0 0.0
    %1000 = vmatprep.subr.mxu0 0.0
    %1001 = vmatpush1.msra.mxu0 0.0
    %1002 = vmatprep.subr.mxu0 0.0
    %1003 = vmatpush1.msra.mxu0 0.0
    %1004 = vmatprep.subr.mxu0 0.0
    %1005 = vmatpush1.msra.mxu0 0.0
    %1006 = vmatprep.subr.mxu0 0.0
    %1007 = vmatpush1.msra.mxu0 0.0
    %1008 = vmatprep.subr.mxu0 0.0
    %1009 = vmatpush1.msra.mxu0 0.0
    %1010 = vmatprep.subr.mxu0 0.0
    %1011 = vmatpush1.msra.mxu0 0.0
    %1012 = vmatprep.subr.mxu0 0.0
    %1013 = vmatpush1.msra.mxu0 0.0
    %1014 = vmatprep.subr.mxu0 0.0
    %1015 = vmatpush1.msra.mxu0 0.0
    %1016 = vmatprep.subr.mxu0 0.0
    %1017 = vmatpush1.msra.mxu0 0.0
    %1018 = vmatprep.subr.mxu0 0.0
    %1019 = vmatpush1.msra.mxu0 0.0
    %1020 = vmatprep.subr.mxu0 0.0
    %1021 = vmatpush1.msra.mxu0 0.0
    %1022 = vmatprep.subr.mxu0 0.0
    %1023 = vmatpush1.msra.mxu0 0.0
    %1024 = vmatprep.subr.mxu0 0.0
    %1025 = vmatpush1.msra.mxu0 0.0
    %1026 = vmatprep.subr.mxu0 0.0
    %1027 = vmatpush1.msra.mxu0 0.0
    %1028 = vmatprep.subr.mxu0 0.0
    %1029 = vmatpush1.msra.mxu0 0.0
    %1030 = vmatprep.subr.mxu0 0.0
    %1031 = vmatpush1.msra.mxu0 0.0
    %1032 = vmatprep.mubr.f32.mxu0 0.0
    %1033 = vmatmul.mubr.f32.gmra.mrb[0].mxu0 %v966
    %v1034 = vpop.f32.mrb[0].mxu0
    %v1035 = vadd.f32 0.0, %v1034
    %v1036 = vpop.f32.mrb[0].mxu0
    %1037 = vdwg.mxu0
    %1038 = vrot.lane.b32.xlu0 %v178, 64
    %v1039 = vpop.permute.xlu0 %1038
    %v1042 = vsel %vm191, %v880, 0
    %1044 = vmatprep.subr.mxu0 0.0
    %1045 = vmatpush1.msra.mxu0 %v1039
    %1046 = vmatprep.subr.mxu0 0.0
    %1047 = vmatpush1.msra.mxu0 0.0
    %1048 = vmatprep.subr.mxu0 0.0
    %1049 = vmatpush1.msra.mxu0 0.0
    %1050 = vmatprep.subr.mxu0 0.0
    %1051 = vmatpush1.msra.mxu0 0.0
    %1052 = vmatprep.subr.mxu0 0.0
    %1053 = vmatpush1.msra.mxu0 0.0
    %1054 = vmatprep.subr.mxu0 0.0
    %1055 = vmatpush1.msra.mxu0 0.0
    %1056 = vmatprep.subr.mxu0 0.0
    %1057 = vmatpush1.msra.mxu0 0.0
    %1058 = vmatprep.subr.mxu0 0.0
    %1059 = vmatpush1.msra.mxu0 0.0
    %1060 = vmatprep.subr.mxu0 0.0
    %1061 = vmatpush1.msra.mxu0 0.0
    %1062 = vmatprep.subr.mxu0 0.0
    %1063 = vmatpush1.msra.mxu0 0.0
    %1064 = vmatprep.subr.mxu0 0.0
    %1065 = vmatpush1.msra.mxu0 0.0
    %1066 = vmatprep.subr.mxu0 0.0
    %1067 = vmatpush1.msra.mxu0 0.0
    %1068 = vmatprep.subr.mxu0 0.0
    %1069 = vmatpush1.msra.mxu0 0.0
    %1070 = vmatprep.subr.mxu0 0.0
    %1071 = vmatpush1.msra.mxu0 0.0
    %1072 = vmatprep.subr.mxu0 0.0
    %1073 = vmatpush1.msra.mxu0 0.0
    %1074 = vmatprep.subr.mxu0 0.0
    %1075 = vmatpush1.msra.mxu0 0.0
    %1076 = vmatprep.subr.mxu0 0.0
    %1077 = vmatpush1.msra.mxu0 0.0
    %1078 = vmatprep.subr.mxu0 0.0
    %1079 = vmatpush1.msra.mxu0 0.0
    %1080 = vmatprep.subr.mxu0 0.0
    %1081 = vmatpush1.msra.mxu0 0.0
    %1082 = vmatprep.subr.mxu0 0.0
    %1083 = vmatpush1.msra.mxu0 0.0
    %1084 = vmatprep.subr.mxu0 0.0
    %1085 = vmatpush1.msra.mxu0 0.0
    %1086 = vmatprep.subr.mxu0 0.0
    %1087 = vmatpush1.msra.mxu0 0.0
    %1088 = vmatprep.subr.mxu0 0.0
    %1089 = vmatpush1.msra.mxu0 0.0
    %1090 = vmatprep.subr.mxu0 0.0
    %1091 = vmatpush1.msra.mxu0 0.0
    %1092 = vmatprep.subr.mxu0 0.0
    %1093 = vmatpush1.msra.mxu0 0.0
    %1094 = vmatprep.subr.mxu0 0.0
    %1095 = vmatpush1.msra.mxu0 0.0
    %1096 = vmatprep.subr.mxu0 0.0
    %1097 = vmatpush1.msra.mxu0 0.0
    %1098 = vmatprep.subr.mxu0 0.0
    %1099 = vmatpush1.msra.mxu0 0.0
    %1100 = vmatprep.subr.mxu0 0.0
    %1101 = vmatpush1.msra.mxu0 0.0
    %1102 = vmatprep.subr.mxu0 0.0
    %1103 = vmatpush1.msra.mxu0 0.0
    %1104 = vmatprep.subr.mxu0 0.0
    %1105 = vmatpush1.msra.mxu0 0.0
    %1106 = vmatprep.subr.mxu0 0.0
    %1107 = vmatpush1.msra.mxu0 0.0
    %1108 = vmatprep.mubr.f32.mxu0 0.0
    %1109 = vmatmul.mubr.f32.gmra.mrb[0].mxu0 %v1042
    %v1110 = vpop.f32.mrb[0].mxu0
    %v1111 = vadd.f32 0.0, %v1110
    %v1112 = vpop.f32.mrb[0].mxu0
    %1113 = vdwg.mxu0
    %1114 = vrot.lane.b32.xlu0 %v180, 64
    %v1115 = vpop.permute.xlu0 %1114
    %v1118 = vsel %vm191, %v881, 0
    %1120 = vmatprep.subr.mxu0 0.0
    %1121 = vmatpush1.msra.mxu0 %v1115
    %1122 = vmatprep.subr.mxu0 0.0
    %1123 = vmatpush1.msra.mxu0 0.0
    %1124 = vmatprep.subr.mxu0 0.0
    %1125 = vmatpush1.msra.mxu0 0.0
    %1126 = vmatprep.subr.mxu0 0.0
    %1127 = vmatpush1.msra.mxu0 0.0
    %1128 = vmatprep.subr.mxu0 0.0
    %1129 = vmatpush1.msra.mxu0 0.0
    %1130 = vmatprep.subr.mxu0 0.0
    %1131 = vmatpush1.msra.mxu0 0.0
    %1132 = vmatprep.subr.mxu0 0.0
    %1133 = vmatpush1.msra.mxu0 0.0
    %1134 = vmatprep.subr.mxu0 0.0
    %1135 = vmatpush1.msra.mxu0 0.0
    %1136 = vmatprep.subr.mxu0 0.0
    %1137 = vmatpush1.msra.mxu0 0.0
    %1138 = vmatprep.subr.mxu0 0.0
    %1139 = vmatpush1.msra.mxu0 0.0
    %1140 = vmatprep.subr.mxu0 0.0
    %1141 = vmatpush1.msra.mxu0 0.0
    %1142 = vmatprep.subr.mxu0 0.0
    %1143 = vmatpush1.msra.mxu0 0.0
    %1144 = vmatprep.subr.mxu0 0.0
    %1145 = vmatpush1.msra.mxu0 0.0
    %1146 = vmatprep.subr.mxu0 0.0
    %1147 = vmatpush1.msra.mxu0 0.0
    %1148 = vmatprep.subr.mxu0 0.0
    %1149 = vmatpush1.msra.mxu0 0.0
    %1150 = vmatprep.subr.mxu0 0.0
    %1151 = vmatpush1.msra.mxu0 0.0
    %1152 = vmatprep.subr.mxu0 0.0
    %1153 = vmatpush1.msra.mxu0 0.0
    %1154 = vmatprep.subr.mxu0 0.0
    %1155 = vmatpush1.msra.mxu0 0.0
    %1156 = vmatprep.subr.mxu0 0.0
    %1157 = vmatpush1.msra.mxu0 0.0
    %1158 = vmatprep.subr.mxu0 0.0
    %1159 = vmatpush1.msra.mxu0 0.0
    %1160 = vmatprep.subr.mxu0 0.0
    %1161 = vmatpush1.msra.mxu0 0.0
    %1162 = vmatprep.subr.mxu0 0.0
    %1163 = vmatpush1.msra.mxu0 0.0
    %1164 = vmatprep.subr.mxu0 0.0
    %1165 = vmatpush1.msra.mxu0 0.0
    %1166 = vmatprep.subr.mxu0 0.0
    %1167 = vmatpush1.msra.mxu0 0.0
    %1168 = vmatprep.subr.mxu0 0.0
    %1169 = vmatpush1.msra.mxu0 0.0
    %1170 = vmatprep.subr.mxu0 0.0
    %1171 = vmatpush1.msra.mxu0 0.0
    %1172 = vmatprep.subr.mxu0 0.0
    %1173 = vmatpush1.msra.mxu0 0.0
    %1174 = vmatprep.subr.mxu0 0.0
    %1175 = vmatpush1.msra.mxu0 0.0
    %1176 = vmatprep.subr.mxu0 0.0
    %1177 = vmatpush1.msra.mxu0 0.0
    %1178 = vmatprep.subr.mxu0 0.0
    %1179 = vmatpush1.msra.mxu0 0.0
    %1180 = vmatprep.subr.mxu0 0.0
    %1181 = vmatpush1.msra.mxu0 0.0
    %1182 = vmatprep.subr.mxu0 0.0
    %1183 = vmatpush1.msra.mxu0 0.0
    %1184 = vmatprep.mubr.f32.mxu0 0.0
    %1185 = vmatmul.mubr.f32.gmra.mrb[0].mxu0 %v1118
    %v1186 = vpop.f32.mrb[0].mxu0
    %v1187 = vadd.f32 0.0, %v1186
    %v1188 = vpop.f32.mrb[0].mxu0
    %1189 = vdwg.mxu0
    %1190 = vrot.lane.b32.xlu0 %v182, 64
    %v1191 = vpop.permute.xlu0 %1190
    %v1194 = vsel %vm191, %v882, 0
    %1196 = vmatprep.subr.mxu0 0.0
    %1197 = vmatpush1.msra.mxu0 %v1191
    %1198 = vmatprep.subr.mxu0 0.0
    %1199 = vmatpush1.msra.mxu0 0.0
    %1200 = vmatprep.subr.mxu0 0.0
    %1201 = vmatpush1.msra.mxu0 0.0
    %1202 = vmatprep.subr.mxu0 0.0
    %1203 = vmatpush1.msra.mxu0 0.0
    %1204 = vmatprep.subr.mxu0 0.0
    %1205 = vmatpush1.msra.mxu0 0.0
    %1206 = vmatprep.subr.mxu0 0.0
    %1207 = vmatpush1.msra.mxu0 0.0
    %1208 = vmatprep.subr.mxu0 0.0
    %1209 = vmatpush1.msra.mxu0 0.0
    %1210 = vmatprep.subr.mxu0 0.0
    %1211 = vmatpush1.msra.mxu0 0.0
    %1212 = vmatprep.subr.mxu0 0.0
    %1213 = vmatpush1.msra.mxu0 0.0
    %1214 = vmatprep.subr.mxu0 0.0
    %1215 = vmatpush1.msra.mxu0 0.0
    %1216 = vmatprep.subr.mxu0 0.0
    %1217 = vmatpush1.msra.mxu0 0.0
    %1218 = vmatprep.subr.mxu0 0.0
    %1219 = vmatpush1.msra.mxu0 0.0
    %1220 = vmatprep.subr.mxu0 0.0
    %1221 = vmatpush1.msra.mxu0 0.0
    %1222 = vmatprep.subr.mxu0 0.0
    %1223 = vmatpush1.msra.mxu0 0.0
    %1224 = vmatprep.subr.mxu0 0.0
    %1225 = vmatpush1.msra.mxu0 0.0
    %1226 = vmatprep.subr.mxu0 0.0
    %1227 = vmatpush1.msra.mxu0 0.0
    %1228 = vmatprep.subr.mxu0 0.0
    %1229 = vmatpush1.msra.mxu0 0.0
    %1230 = vmatprep.subr.mxu0 0.0
    %1231 = vmatpush1.msra.mxu0 0.0
    %1232 = vmatprep.subr.mxu0 0.0
    %1233 = vmatpush1.msra.mxu0 0.0
    %1234 = vmatprep.subr.mxu0 0.0
    %1235 = vmatpush1.msra.mxu0 0.0
    %1236 = vmatprep.subr.mxu0 0.0
    %1237 = vmatpush1.msra.mxu0 0.0
    %1238 = vmatprep.subr.mxu0 0.0
    %1239 = vmatpush1.msra.mxu0 0.0
    %1240 = vmatprep.subr.mxu0 0.0
    %1241 = vmatpush1.msra.mxu0 0.0
    %1242 = vmatprep.subr.mxu0 0.0
    %1243 = vmatpush1.msra.mxu0 0.0
    %1244 = vmatprep.subr.mxu0 0.0
    %1245 = vmatpush1.msra.mxu0 0.0
    %1246 = vmatprep.subr.mxu0 0.0
    %1247 = vmatpush1.msra.mxu0 0.0
    %1248 = vmatprep.subr.mxu0 0.0
    %1249 = vmatpush1.msra.mxu0 0.0
    %1250 = vmatprep.subr.mxu0 0.0
    %1251 = vmatpush1.msra.mxu0 0.0
    %1252 = vmatprep.subr.mxu0 0.0
    %1253 = vmatpush1.msra.mxu0 0.0
    %1254 = vmatprep.subr.mxu0 0.0
    %1255 = vmatpush1.msra.mxu0 0.0
    %1256 = vmatprep.subr.mxu0 0.0
    %1257 = vmatpush1.msra.mxu0 0.0
    %1258 = vmatprep.subr.mxu0 0.0
    %1259 = vmatpush1.msra.mxu0 0.0
    %1260 = vmatprep.mubr.f32.mxu0 0.0
    %1261 = vmatmul.mubr.f32.gmra.mrb[0].mxu0 %v1194
    %v1262 = vpop.f32.mrb[0].mxu0
    %v1263 = vadd.f32 0.0, %v1262
    %v1264 = vpop.f32.mrb[0].mxu0
    %1265 = vdwg.mxu0
    %1266 = vrot.lane.b32.xlu0 %v184, 64
    %v1267 = vpop.permute.xlu0 %1266
    %v1270 = vsel %vm191, %v883, 0
    %1272 = vmatprep.subr.mxu0 0.0
    %1273 = vmatpush1.msra.mxu0 %v1267
    %1274 = vmatprep.subr.mxu0 0.0
    %1275 = vmatpush1.msra.mxu0 0.0
    %1276 = vmatprep.subr.mxu0 0.0
    %1277 = vmatpush1.msra.mxu0 0.0
    %1278 = vmatprep.subr.mxu0 0.0
    %1279 = vmatpush1.msra.mxu0 0.0
    %1280 = vmatprep.subr.mxu0 0.0
    %1281 = vmatpush1.msra.mxu0 0.0
    %1282 = vmatprep.subr.mxu0 0.0
    %1283 = vmatpush1.msra.mxu0 0.0
    %1284 = vmatprep.subr.mxu0 0.0
    %1285 = vmatpush1.msra.mxu0 0.0
    %1286 = vmatprep.subr.mxu0 0.0
    %1287 = vmatpush1.msra.mxu0 0.0
    %1288 = vmatprep.subr.mxu0 0.0
    %1289 = vmatpush1.msra.mxu0 0.0
    %1290 = vmatprep.subr.mxu0 0.0
    %1291 = vmatpush1.msra.mxu0 0.0
    %1292 = vmatprep.subr.mxu0 0.0
    %1293 = vmatpush1.msra.mxu0 0.0
    %1294 = vmatprep.subr.mxu0 0.0
    %1295 = vmatpush1.msra.mxu0 0.0
    %1296 = vmatprep.subr.mxu0 0.0
    %1297 = vmatpush1.msra.mxu0 0.0
    %1298 = vmatprep.subr.mxu0 0.0
    %1299 = vmatpush1.msra.mxu0 0.0
    %1300 = vmatprep.subr.mxu0 0.0
    %1301 = vmatpush1.msra.mxu0 0.0
    %1302 = vmatprep.subr.mxu0 0.0
    %1303 = vmatpush1.msra.mxu0 0.0
    %1304 = vmatprep.subr.mxu0 0.0
    %1305 = vmatpush1.msra.mxu0 0.0
    %1306 = vmatprep.subr.mxu0 0.0
    %1307 = vmatpush1.msra.mxu0 0.0
    %1308 = vmatprep.subr.mxu0 0.0
    %1309 = vmatpush1.msra.mxu0 0.0
    %1310 = vmatprep.subr.mxu0 0.0
    %1311 = vmatpush1.msra.mxu0 0.0
    %1312 = vmatprep.subr.mxu0 0.0
    %1313 = vmatpush1.msra.mxu0 0.0
    %1314 = vmatprep.subr.mxu0 0.0
    %1315 = vmatpush1.msra.mxu0 0.0
    %1316 = vmatprep.subr.mxu0 0.0
    %1317 = vmatpush1.msra.mxu0 0.0
    %1318 = vmatprep.subr.mxu0 0.0
    %1319 = vmatpush1.msra.mxu0 0.0
    %1320 = vmatprep.subr.mxu0 0.0
    %1321 = vmatpush1.msra.mxu0 0.0
    %1322 = vmatprep.subr.mxu0 0.0
    %1323 = vmatpush1.msra.mxu0 0.0
    %1324 = vmatprep.subr.mxu0 0.0
    %1325 = vmatpush1.msra.mxu0 0.0
    %1326 = vmatprep.subr.mxu0 0.0
    %1327 = vmatpush1.msra.mxu0 0.0
    %1328 = vmatprep.subr.mxu0 0.0
    %1329 = vmatpush1.msra.mxu0 0.0
    %1330 = vmatprep.subr.mxu0 0.0
    %1331 = vmatpush1.msra.mxu0 0.0
    %1332 = vmatprep.subr.mxu0 0.0
    %1333 = vmatpush1.msra.mxu0 0.0
    %1334 = vmatprep.subr.mxu0 0.0
    %1335 = vmatpush1.msra.mxu0 0.0
    %1336 = vmatprep.mubr.f32.mxu0 0.0
    %1337 = vmatmul.mubr.f32.gmra.mrb[0].mxu0 %v1270
    %v1338 = vpop.f32.mrb[0].mxu0
    %v1339 = vadd.f32 0.0, %v1338
    %v1340 = vpop.f32.mrb[0].mxu0
    %1341 = vdwg.mxu0
    %1342 = vrot.lane.b32.xlu0 %v186, 64
    %v1343 = vpop.permute.xlu0 %1342
    %v1346 = vsel %vm191, %v884, 0
    %1348 = vmatprep.subr.mxu0 0.0
    %1349 = vmatpush1.msra.mxu0 %v1343
    %1350 = vmatprep.subr.mxu0 0.0
    %1351 = vmatpush1.msra.mxu0 0.0
    %1352 = vmatprep.subr.mxu0 0.0
    %1353 = vmatpush1.msra.mxu0 0.0
    %1354 = vmatprep.subr.mxu0 0.0
    %1355 = vmatpush1.msra.mxu0 0.0
    %1356 = vmatprep.subr.mxu0 0.0
    %1357 = vmatpush1.msra.mxu0 0.0
    %1358 = vmatprep.subr.mxu0 0.0
    %1359 = vmatpush1.msra.mxu0 0.0
    %1360 = vmatprep.subr.mxu0 0.0
    %1361 = vmatpush1.msra.mxu0 0.0
    %1362 = vmatprep.subr.mxu0 0.0
    %1363 = vmatpush1.msra.mxu0 0.0
    %1364 = vmatprep.subr.mxu0 0.0
    %1365 = vmatpush1.msra.mxu0 0.0
    %1366 = vmatprep.subr.mxu0 0.0
    %1367 = vmatpush1.msra.mxu0 0.0
    %1368 = vmatprep.subr.mxu0 0.0
    %1369 = vmatpush1.msra.mxu0 0.0
    %1370 = vmatprep.subr.mxu0 0.0
    %1371 = vmatpush1.msra.mxu0 0.0
    %1372 = vmatprep.subr.mxu0 0.0
    %1373 = vmatpush1.msra.mxu0 0.0
    %1374 = vmatprep.subr.mxu0 0.0
    %1375 = vmatpush1.msra.mxu0 0.0
    %1376 = vmatprep.subr.mxu0 0.0
    %1377 = vmatpush1.msra.mxu0 0.0
    %1378 = vmatprep.subr.mxu0 0.0
    %1379 = vmatpush1.msra.mxu0 0.0
    %1380 = vmatprep.subr.mxu0 0.0
    %1381 = vmatpush1.msra.mxu0 0.0
    %1382 = vmatprep.subr.mxu0 0.0
    %1383 = vmatpush1.msra.mxu0 0.0
    %1384 = vmatprep.subr.mxu0 0.0
    %1385 = vmatpush1.msra.mxu0 0.0
    %1386 = vmatprep.subr.mxu0 0.0
    %1387 = vmatpush1.msra.mxu0 0.0
    %1388 = vmatprep.subr.mxu0 0.0
    %1389 = vmatpush1.msra.mxu0 0.0
    %1390 = vmatprep.subr.mxu0 0.0
    %1391 = vmatpush1.msra.mxu0 0.0
    %1392 = vmatprep.subr.mxu0 0.0
    %1393 = vmatpush1.msra.mxu0 0.0
    %1394 = vmatprep.subr.mxu0 0.0
    %1395 = vmatpush1.msra.mxu0 0.0
    %1396 = vmatprep.subr.mxu0 0.0
    %1397 = vmatpush1.msra.mxu0 0.0
    %1398 = vmatprep.subr.mxu0 0.0
    %1399 = vmatpush1.msra.mxu0 0.0
    %1400 = vmatprep.subr.mxu0 0.0
    %1401 = vmatpush1.msra.mxu0 0.0
    %1402 = vmatprep.subr.mxu0 0.0
    %1403 = vmatpush1.msra.mxu0 0.0
    %1404 = vmatprep.subr.mxu0 0.0
    %1405 = vmatpush1.msra.mxu0 0.0
    %1406 = vmatprep.subr.mxu0 0.0
    %1407 = vmatpush1.msra.mxu0 0.0
    %1408 = vmatprep.subr.mxu0 0.0
    %1409 = vmatpush1.msra.mxu0 0.0
    %1410 = vmatprep.subr.mxu0 0.0
    %1411 = vmatpush1.msra.mxu0 0.0
    %1412 = vmatprep.mubr.f32.mxu0 0.0
    %1413 = vmatmul.mubr.f32.gmra.mrb[0].mxu0 %v1346
    %v1414 = vpop.f32.mrb[0].mxu0
    %v1415 = vadd.f32 0.0, %v1414
    %v1416 = vpop.f32.mrb[0].mxu0
    %1417 = vdwg.mxu0
    %1418 = vrot.lane.b32.xlu0 %v188, 64
    %v1419 = vpop.permute.xlu0 %1418
    %v1422 = vsel %vm191, %v885, 0
    %1424 = vmatprep.subr.mxu0 0.0
    %1425 = vmatpush1.msra.mxu0 %v1419
    %1426 = vmatprep.subr.mxu0 0.0
    %1427 = vmatpush1.msra.mxu0 0.0
    %1428 = vmatprep.subr.mxu0 0.0
    %1429 = vmatpush1.msra.mxu0 0.0
    %1430 = vmatprep.subr.mxu0 0.0
    %1431 = vmatpush1.msra.mxu0 0.0
    %1432 = vmatprep.subr.mxu0 0.0
    %1433 = vmatpush1.msra.mxu0 0.0
    %1434 = vmatprep.subr.mxu0 0.0
    %1435 = vmatpush1.msra.mxu0 0.0
    %1436 = vmatprep.subr.mxu0 0.0
    %1437 = vmatpush1.msra.mxu0 0.0
    %1438 = vmatprep.subr.mxu0 0.0
    %1439 = vmatpush1.msra.mxu0 0.0
    %1440 = vmatprep.subr.mxu0 0.0
    %1441 = vmatpush1.msra.mxu0 0.0
    %1442 = vmatprep.subr.mxu0 0.0
    %1443 = vmatpush1.msra.mxu0 0.0
    %1444 = vmatprep.subr.mxu0 0.0
    %1445 = vmatpush1.msra.mxu0 0.0
    %1446 = vmatprep.subr.mxu0 0.0
    %1447 = vmatpush1.msra.mxu0 0.0
    %1448 = vmatprep.subr.mxu0 0.0
    %1449 = vmatpush1.msra.mxu0 0.0
    %1450 = vmatprep.subr.mxu0 0.0
    %1451 = vmatpush1.msra.mxu0 0.0
    %1452 = vmatprep.subr.mxu0 0.0
    %1453 = vmatpush1.msra.mxu0 0.0
    %1454 = vmatprep.subr.mxu0 0.0
    %1455 = vmatpush1.msra.mxu0 0.0
    %1456 = vmatprep.subr.mxu0 0.0
    %1457 = vmatpush1.msra.mxu0 0.0
    %1458 = vmatprep.subr.mxu0 0.0
    %1459 = vmatpush1.msra.mxu0 0.0
    %1460 = vmatprep.subr.mxu0 0.0
    %1461 = vmatpush1.msra.mxu0 0.0
    %1462 = vmatprep.subr.mxu0 0.0
    %1463 = vmatpush1.msra.mxu0 0.0
    %1464 = vmatprep.subr.mxu0 0.0
    %1465 = vmatpush1.msra.mxu0 0.0
    %1466 = vmatprep.subr.mxu0 0.0
    %1467 = vmatpush1.msra.mxu0 0.0
    %1468 = vmatprep.subr.mxu0 0.0
    %1469 = vmatpush1.msra.mxu0 0.0
    %1470 = vmatprep.subr.mxu0 0.0
    %1471 = vmatpush1.msra.mxu0 0.0
    %1472 = vmatprep.subr.mxu0 0.0
    %1473 = vmatpush1.msra.mxu0 0.0
    %1474 = vmatprep.subr.mxu0 0.0
    %1475 = vmatpush1.msra.mxu0 0.0
    %1476 = vmatprep.subr.mxu0 0.0
    %1477 = vmatpush1.msra.mxu0 0.0
    %1478 = vmatprep.subr.mxu0 0.0
    %1479 = vmatpush1.msra.mxu0 0.0
    %1480 = vmatprep.subr.mxu0 0.0
    %1481 = vmatpush1.msra.mxu0 0.0
    %1482 = vmatprep.subr.mxu0 0.0
    %1483 = vmatpush1.msra.mxu0 0.0
    %1484 = vmatprep.subr.mxu0 0.0
    %1485 = vmatpush1.msra.mxu0 0.0
    %1486 = vmatprep.subr.mxu0 0.0
    %1487 = vmatpush1.msra.mxu0 0.0
    %1488 = vmatprep.mubr.f32.mxu0 0.0
    %1489 = vmatmul.mubr.f32.gmra.mrb[0].mxu0 %v1422
    %v1490 = vpop.f32.mrb[0].mxu0
    %v1491 = vadd.f32 0.0, %v1490
    %v1492 = vpop.f32.mrb[0].mxu0
    %1493 = vdwg.mxu0
    %1496 = vrot.lane.b32.xlu0 %v1111, 8
    %v1497 = vpop.permute.xlu0 %1496
    %1498 = vrot.lane.b32.xlu0 %v1187, 8
    %v1499 = vpop.permute.xlu0 %1498
    %1504 = vrot.lane.b32.xlu0 %v1263, 16
    %v1505 = vpop.permute.xlu0 %1504
    %1506 = vrot.lane.b32.xlu0 %v1339, 16
    %v1507 = vpop.permute.xlu0 %1506
    %1512 = vrot.lane.b32.xlu0 %v1415, 24
    %v1513 = vpop.permute.xlu0 %1512
    %1514 = vrot.lane.b32.xlu0 %v1491, 24
    %v1515 = vpop.permute.xlu0 %1514
    %v1518 = vsel %vm191, %v959, %v1497
    %v1519 = vsel %vm191, %v1035, %v1499
    %vm1520 = vcmask 130048
    %v1521 = vsel %vm1520, %v1518, %v1505
    %v1522 = vsel %vm1520, %v1519, %v1507
    %vm1523 = vcmask 195584
    %v1524 = vsel %vm1523, %v1521, %v1513
    %v1525 = vsel %vm1523, %v1522, %v1515
    %v1526 = vld [vmem:[%s4] sm:$0xff]
    %v1527 = vld [vmem:[%s4 + $0x8] sm:$0xff]
    %v1528 = vld [vmem:[%s4 + $0x10] sm:$0xff]
    %v1529 = vld [vmem:[%s4 + $0x18] sm:$0xff]
    %v1530 = vld [vmem:[%s5] sm:$0x1]
    %v1532 = vlaneseq
    %v1533 = vshrl.u32 %v1532, 7
    %v1534 = vsub.s32 0, %v1533
    %v1535 = vrot.slane %v1530, %v1534
    %v1538 = vsel %vm46, %v1524, 0
    %v1541 = vsel %vm46, %v1525, 0
    %1543 = vmatprep.subr.mxu0 0.0
    %1544 = vmatpush1.msra.mxu0 %v1526
    %1545 = vmatprep.subr.mxu0 0.0
    %1546 = vmatpush1.msra.mxu0 %v1527
    %1547 = vmatprep.subr.mxu0 0.0
    %1548 = vmatpush1.msra.mxu0 %v1528
    %1549 = vmatprep.subr.mxu0 0.0
    %1550 = vmatpush1.msra.mxu0 %v1529
    %1551 = vmatprep.subr.mxu0 0.0
    %1552 = vmatpush1.msra.mxu0 0.0
    %1553 = vmatprep.subr.mxu0 0.0
    %1554 = vmatpush1.msra.mxu0 0.0
    %1555 = vmatprep.subr.mxu0 0.0
    %1556 = vmatpush1.msra.mxu0 0.0
    %1557 = vmatprep.subr.mxu0 0.0
    %1558 = vmatpush1.msra.mxu0 0.0
    %1559 = vmatprep.subr.mxu0 0.0
    %1560 = vmatpush1.msra.mxu0 0.0
    %1561 = vmatprep.subr.mxu0 0.0
    %1562 = vmatpush1.msra.mxu0 0.0
    %1563 = vmatprep.subr.mxu0 0.0
    %1564 = vmatpush1.msra.mxu0 0.0
    %1565 = vmatprep.subr.mxu0 0.0
    %1566 = vmatpush1.msra.mxu0 0.0
    %1567 = vmatprep.subr.mxu0 0.0
    %1568 = vmatpush1.msra.mxu0 0.0
    %1569 = vmatprep.subr.mxu0 0.0
    %1570 = vmatpush1.msra.mxu0 0.0
    %1571 = vmatprep.subr.mxu0 0.0
    %1572 = vmatpush1.msra.mxu0 0.0
    %1573 = vmatprep.subr.mxu0 0.0
    %1574 = vmatpush1.msra.mxu0 0.0
    %1575 = vmatprep.subr.mxu0 0.0
    %1576 = vmatpush1.msra.mxu0 0.0
    %1577 = vmatprep.subr.mxu0 0.0
    %1578 = vmatpush1.msra.mxu0 0.0
    %1579 = vmatprep.subr.mxu0 0.0
    %1580 = vmatpush1.msra.mxu0 0.0
    %1581 = vmatprep.subr.mxu0 0.0
    %1582 = vmatpush1.msra.mxu0 0.0
    %1583 = vmatprep.subr.mxu0 0.0
    %1584 = vmatpush1.msra.mxu0 0.0
    %1585 = vmatprep.subr.mxu0 0.0
    %1586 = vmatpush1.msra.mxu0 0.0
    %1587 = vmatprep.subr.mxu0 0.0
    %1588 = vmatpush1.msra.mxu0 0.0
    %1589 = vmatprep.subr.mxu0 0.0
    %1590 = vmatpush1.msra.mxu0 0.0
    %1591 = vmatprep.subr.mxu0 0.0
    %1592 = vmatpush1.msra.mxu0 0.0
    %1593 = vmatprep.subr.mxu0 0.0
    %1594 = vmatpush1.msra.mxu0 0.0
    %1595 = vmatprep.subr.mxu0 0.0
    %1596 = vmatpush1.msra.mxu0 0.0
    %1597 = vmatprep.subr.mxu0 0.0
    %1598 = vmatpush1.msra.mxu0 0.0
    %1599 = vmatprep.subr.mxu0 0.0
    %1600 = vmatpush1.msra.mxu0 0.0
    %1601 = vmatprep.subr.mxu0 0.0
    %1602 = vmatpush1.msra.mxu0 0.0
    %1603 = vmatprep.subr.mxu0 0.0
    %1604 = vmatpush1.msra.mxu0 0.0
    %1605 = vmatprep.subr.mxu0 0.0
    %1606 = vmatpush1.msra.mxu0 0.0
    %1607 = vmatprep.mubr.f32.mxu0 0.0
    %1608 = vmatmul.mubr.f32.gmra.mrb[0].mxu0 %v1538
    %v1609 = vpop.f32.mrb[0].mxu0
    %v1610 = vadd.f32 %v1535, %v1609
    %v1611 = vpop.f32.mrb[0].mxu0
    %1612 = vmatprep.mubr.f32.mxu0 0.0
    %1613 = vmatmul.mubr.f32.gmra.mrb[0].mxu0 %v1541
    %v1614 = vpop.f32.mrb[0].mxu0
    %v1615 = vadd.f32 %v1535, %v1614
    %v1616 = vpop.f32.mrb[0].mxu0
    %1617 = vdwg.mxu0
    %v1618 = vadd.f32 %v1610, %v42
    %v1619 = vadd.f32 %v1615, %v43
    %v1620 = vld [vmem:[%s6] sm:$0x1]
    %v1621 = vld [vmem:[%s7] sm:$0x1]
    %v1622 = vsel %vm46, %v1618, 0.0
    %1623 = vadd.xlane.f32.xlu0 %v1622
    %v1624 = vpop.xlane.xlu0 %1623
    %v1625 = vsel %vm46, %v1619, 0.0
    %1626 = vadd.xlane.f32.xlu0 %v1625
    %v1627 = vpop.xlane.xlu0 %1626
    %v1628 = vmul.f32 %v1624, %v53
    %v1629 = vmul.f32 %v1627, %v53
    %v1630 = vsub.f32 %v1618, %v1628
    %v1631 = vsub.f32 %v1619, %v1629
    %v1632 = vmul.f32 %v1630, %v1630
    %v1633 = vmul.f32 %v1631, %v1631
    %v1634 = vsel %vm46, %v1632, 0.0
    %1635 = vadd.xlane.f32.xlu0 %v1634
    %v1636 = vpop.xlane.xlu0 %1635
    %v1637 = vsel %vm46, %v1633, 0.0
    %1638 = vadd.xlane.f32.xlu0 %v1637
    %v1639 = vpop.xlane.xlu0 %1638
    %v1640 = vmul.f32 %v1636, %v53
    %v1641 = vmul.f32 %v1639, %v53
    %v1642 = vadd.f32 %v1640, 1e-05
    %v1643 = vadd.f32 %v1641, 1e-05
    %v1644 = vrsqrt.pop %v1642
    %v1645 = vrsqrt.pop %v1643
    %v1646 = vmul.f32 %v1630, %v1644
    %v1647 = vmul.f32 %v1631, %v1645
    %v1649 = vlaneseq
    %v1650 = vshrl.u32 %v1649, 7
    %v1651 = vsub.s32 0, %v1650
    %v1652 = vrot.slane %v1620, %v1651
    %v1654 = vmul.f32 %v1646, %v1652
    %v1655 = vmul.f32 %v1647, %v1652
    %v1657 = vlaneseq
    %v1658 = vshrl.u32 %v1657, 7
    %v1659 = vsub.s32 0, %v1658
    %v1660 = vrot.slane %v1621, %v1659
    %v1662 = vadd.f32 %v1654, %v1660
    %v1663 = vadd.f32 %v1655, %v1660
    %v1664 = vld [vmem:[%s8] sm:$0xff]
    %v1665 = vld [vmem:[%s8 + $0x8] sm:$0xff]
    %v1666 = vld [vmem:[%s8 + $0x10] sm:$0xff]
    %v1667 = vld [vmem:[%s8 + $0x18] sm:$0xff]
    %v1668 = vld [vmem:[%s9] sm:$0x1]
    %v1670 = vlaneseq
    %v1671 = vshrl.u32 %v1670, 7
    %v1672 = vsub.s32 0, %v1671
    %v1673 = vrot.slane %v1668, %v1672
    %v1676 = vsel %vm46, %v1662, 0
    %v1679 = vsel %vm46, %v1663, 0
    %1681 = vmatprep.subr.mxu0 0.0
    %1682 = vmatpush1.msra.mxu0 %v1664
    %1683 = vmatprep.subr.mxu0 0.0
    %1684 = vmatpush1.msra.mxu0 %v1665
    %1685 = vmatprep.subr.mxu0 0.0
    %1686 = vmatpush1.msra.mxu0 %v1666
    %1687 = vmatprep.subr.mxu0 0.0
    %1688 = vmatpush1.msra.mxu0 %v1667
    %1689 = vmatprep.subr.mxu0 0.0
    %1690 = vmatpush1.msra.mxu0 0.0
    %1691 = vmatprep.subr.mxu0 0.0
    %1692 = vmatpush1.msra.mxu0 0.0
    %1693 = vmatprep.subr.mxu0 0.0
    %1694 = vmatpush1.msra.mxu0 0.0
    %1695 = vmatprep.subr.mxu0 0.0
    %1696 = vmatpush1.msra.mxu0 0.0
    %1697 = vmatprep.subr.mxu0 0.0
    %1698 = vmatpush1.msra.mxu0 0.0
    %1699 = vmatprep.subr.mxu0 0.0
    %1700 = vmatpush1.msra.mxu0 0.0
    %1701 = vmatprep.subr.mxu0 0.0
    %1702 = vmatpush1.msra.mxu0 0.0
    %1703 = vmatprep.subr.mxu0 0.0
    %1704 = vmatpush1.msra.mxu0 0.0
    %1705 = vmatprep.subr.mxu0 0.0
    %1706 = vmatpush1.msra.mxu0 0.0
    %1707 = vmatprep.subr.mxu0 0.0
    %1708 = vmatpush1.msra.mxu0 0.0
    %1709 = vmatprep.subr.mxu0 0.0
    %1710 = vmatpush1.msra.mxu0 0.0
    %1711 = vmatprep.subr.mxu0 0.0
    %1712 = vmatpush1.msra.mxu0 0.0
    %1713 = vmatprep.subr.mxu0 0.0
    %1714 = vmatpush1.msra.mxu0 0.0
    %1715 = vmatprep.subr.mxu0 0.0
    %1716 = vmatpush1.msra.mxu0 0.0
    %1717 = vmatprep.subr.mxu0 0.0
    %1718 = vmatpush1.msra.mxu0 0.0
    %1719 = vmatprep.subr.mxu0 0.0
    %1720 = vmatpush1.msra.mxu0 0.0
    %1721 = vmatprep.subr.mxu0 0.0
    %1722 = vmatpush1.msra.mxu0 0.0
    %1723 = vmatprep.subr.mxu0 0.0
    %1724 = vmatpush1.msra.mxu0 0.0
    %1725 = vmatprep.subr.mxu0 0.0
    %1726 = vmatpush1.msra.mxu0 0.0
    %1727 = vmatprep.subr.mxu0 0.0
    %1728 = vmatpush1.msra.mxu0 0.0
    %1729 = vmatprep.subr.mxu0 0.0
    %1730 = vmatpush1.msra.mxu0 0.0
    %1731 = vmatprep.subr.mxu0 0.0
    %1732 = vmatpush1.msra.mxu0 0.0
    %1733 = vmatprep.subr.mxu0 0.0
    %1734 = vmatpush1.msra.mxu0 0.0
    %1735 = vmatprep.subr.mxu0 0.0
    %1736 = vmatpush1.msra.mxu0 0.0
    %1737 = vmatprep.subr.mxu0 0.0
    %1738 = vmatpush1.msra.mxu0 0.0
    %1739 = vmatprep.subr.mxu0 0.0
    %1740 = vmatpush1.msra.mxu0 0.0
    %1741 = vmatprep.subr.mxu0 0.0
    %1742 = vmatpush1.msra.mxu0 0.0
    %1743 = vmatprep.subr.mxu0 0.0
    %1744 = vmatpush1.msra.mxu0 0.0
    %1745 = vmatprep.mubr.f32.mxu0 0.0
    %1746 = vmatmul.mubr.f32.gmra.mrb[0].mxu0 %v1676
    %v1747 = vpop.f32.mrb[0].mxu0
    %v1748 = vadd.f32 %v1673, %v1747
    %v1749 = vpop.f32.mrb[0].mxu0
    %1750 = vmatprep.mubr.f32.mxu0 0.0
    %1751 = vmatmul.mubr.f32.gmra.mrb[0].mxu0 %v1679
    %v1752 = vpop.f32.mrb[0].mxu0
    %v1753 = vadd.f32 %v1673, %v1752
    %v1754 = vpop.f32.mrb[0].mxu0
    %1755 = vdwg.mxu0
    %v1756 = vmul.f32 %v1748, 0.5
    %v1757 = vmul.f32 %v1753, 0.5
    %v1758 = vmul.f32 %v1748, 0.70710677
    %v1759 = vmul.f32 %v1753, 0.70710677
    %v1760 = verf.f32.pop %v1758
    %v1761 = verf.f32.pop %v1759
    %v1762 = vadd.f32 %v1760, 1.0
    %v1763 = vadd.f32 %v1761, 1.0
    %v1764 = vmul.f32 %v1756, %v1762
    %v1765 = vmul.f32 %v1757, %v1763
    %v1766 = vld [vmem:[%s10] sm:$0xff]
    %v1767 = vld [vmem:[%s10 + $0x8] sm:$0xff]
    %v1768 = vld [vmem:[%s10 + $0x10] sm:$0xff]
    %v1769 = vld [vmem:[%s10 + $0x18] sm:$0xff]
    %v1770 = vld [vmem:[%s10 + $0x20] sm:$0xff]
    %v1771 = vld [vmem:[%s10 + $0x28] sm:$0xff]
    %v1772 = vld [vmem:[%s10 + $0x30] sm:$0xff]
    %v1773 = vld [vmem:[%s10 + $0x38] sm:$0xff]
    %v1774 = vld [vmem:[%s10 + $0x40] sm:$0xff]
    %v1775 = vld [vmem:[%s10 + $0x48] sm:$0xff]
    %v1776 = vld [vmem:[%s10 + $0x50] sm:$0xff]
    %v1777 = vld [vmem:[%s10 + $0x58] sm:$0xff]
    %v1778 = vld [vmem:[%s10 + $0x60] sm:$0xff]
    %v1779 = vld [vmem:[%s10 + $0x68] sm:$0xff]
    %v1780 = vld [vmem:[%s10 + $0x70] sm:$0xff]
    %v1781 = vld [vmem:[%s10 + $0x78] sm:$0xff]
    %v1782 = vld [vmem:[%s11] sm:$0x1]
    %v1784 = vlaneseq
    %v1785 = vshrl.u32 %v1784, 7
    %v1786 = vsub.s32 0, %v1785
    %v1787 = vrot.slane %v1782, %v1786
    %1789 = vmatprep.subr.mxu0 0.0
    %1790 = vmatpush1.msra.mxu0 %v1766
    %1791 = vmatprep.subr.mxu0 0.0
    %1792 = vmatpush1.msra.mxu0 %v1767
    %1793 = vmatprep.subr.mxu0 0.0
    %1794 = vmatpush1.msra.mxu0 %v1768
    %1795 = vmatprep.subr.mxu0 0.0
    %1796 = vmatpush1.msra.mxu0 %v1769
    %1797 = vmatprep.subr.mxu0 0.0
    %1798 = vmatpush1.msra.mxu0 %v1770
    %1799 = vmatprep.subr.mxu0 0.0
    %1800 = vmatpush1.msra.mxu0 %v1771
    %1801 = vmatprep.subr.mxu0 0.0
    %1802 = vmatpush1.msra.mxu0 %v1772
    %1803 = vmatprep.subr.mxu0 0.0
    %1804 = vmatpush1.msra.mxu0 %v1773
    %1805 = vmatprep.subr.mxu0 0.0
    %1806 = vmatpush1.msra.mxu0 %v1774
    %1807 = vmatprep.subr.mxu0 0.0
    %1808 = vmatpush1.msra.mxu0 %v1775
    %1809 = vmatprep.subr.mxu0 0.0
    %1810 = vmatpush1.msra.mxu0 %v1776
    %1811 = vmatprep.subr.mxu0 0.0
    %1812 = vmatpush1.msra.mxu0 %v1777
    %1813 = vmatprep.subr.mxu0 0.0
    %1814 = vmatpush1.msra.mxu0 %v1778
    %1815 = vmatprep.subr.mxu0 0.0
    %1816 = vmatpush1.msra.mxu0 %v1779
    %1817 = vmatprep.subr.mxu0 0.0
    %1818 = vmatpush1.msra.mxu0 %v1780
    %1819 = vmatprep.subr.mxu0 0.0
    %1820 = vmatpush1.msra.mxu0 %v1781
    %1821 = vmatprep.subr.mxu0 0.0
    %1822 = vmatpush1.msra.mxu0 0.0
    %1823 = vmatprep.subr.mxu0 0.0
    %1824 = vmatpush1.msra.mxu0 0.0
    %1825 = vmatprep.subr.mxu0 0.0
    %1826 = vmatpush1.msra.mxu0 0.0
    %1827 = vmatprep.subr.mxu0 0.0
    %1828 = vmatpush1.msra.mxu0 0.0
    %1829 = vmatprep.subr.mxu0 0.0
    %1830 = vmatpush1.msra.mxu0 0.0
    %1831 = vmatprep.subr.mxu0 0.0
    %1832 = vmatpush1.msra.mxu0 0.0
    %1833 = vmatprep.subr.mxu0 0.0
    %1834 = vmatpush1.msra.mxu0 0.0
    %1835 = vmatprep.subr.mxu0 0.0
    %1836 = vmatpush1.msra.mxu0 0.0
    %1837 = vmatprep.subr.mxu0 0.0
    %1838 = vmatpush1.msra.mxu0 0.0
    %1839 = vmatprep.subr.mxu0 0.0
    %1840 = vmatpush1.msra.mxu0 0.0
    %1841 = vmatprep.subr.mxu0 0.0
    %1842 = vmatpush1.msra.mxu0 0.0
    %1843 = vmatprep.subr.mxu0 0.0
    %1844 = vmatpush1.msra.mxu0 0.0
    %1845 = vmatprep.subr.mxu0 0.0
    %1846 = vmatpush1.msra.mxu0 0.0
    %1847 = vmatprep.subr.mxu0 0.0
    %1848 = vmatpush1.msra.mxu0 0.0
    %1849 = vmatprep.subr.mxu0 0.0
    %1850 = vmatpush1.msra.mxu0 0.0
    %1851 = vmatprep.subr.mxu0 0.0
    %1852 = vmatpush1.msra.mxu0 0.0
    %1853 = vmatprep.mubr.f32.mxu0 0.0
    %1854 = vmatmul.mubr.f32.gmra.mrb[0].mxu0 %v1764
    %v1855 = vpop.f32.mrb[0].mxu0
    %v1856 = vadd.f32 %v1787, %v1855
    %v1857 = vpop.f32.mrb[0].mxu0
    %1858 = vmatprep.mubr.f32.mxu0 0.0
    %1859 = vmatmul.mubr.f32.gmra.mrb[0].mxu0 %v1765
    %v1860 = vpop.f32.mrb[0].mxu0
    %v1861 = vadd.f32 %v1787, %v1860
    %v1862 = vpop.f32.mrb[0].mxu0
    %1863 = vdwg.mxu0
    %v1864 = vadd.f32 %v1856, %v1618
    %v1865 = vadd.f32 %v1861, %v1619
    %1866 = vst.msk [vmem:[#allocation2] sm:$0xff] %vm46, %v1864
    %1867 = vst.msk [vmem:[#allocation2 + $0x8] sm:$0xff] %vm46, %v1865
    // Predicated region
    $region50: #{tpu_custom_call.1} parent=1 // pred_check
      _
    $region51: #{tpu_custom_call.1} parent=1 // pred_check_branch
      %1869 = sbr.rel (0) target = $region53
    $region52: #{tpu_custom_call.1} parent=1 // pred_region
      %s1871 = ssub.s32 256, 256
      %1872 = vsyncadd [#allocation3], %s1871
      %s1873 = sshll.u32 [#allocation2], 4
      %s1874 = int_to_ptr.vmem [resolvable:$true] %s1873
      %1879 = dma.vmem_to_hbm [thread:$0]  %s1874, 256, %s12, [#allocation3], 128, 128, 8
    $region53: #{tpu_custom_call.1} parent=1 // pred_fallthru
      _
    // Predicated region
    $region54: #{tpu_custom_call.1} parent=1 // pred_check
      _
    $region55: #{tpu_custom_call.1} parent=1 // pred_check_branch
      %1881 = sbr.rel (0) target = $region57
    $region56: #{tpu_custom_call.1} parent=1 // pred_region
      %1882 = dma.done [#allocation3], 256
    $region57: #{tpu_custom_call.1} parent=1 // pred_fallthru
      _
    %1883 = vsyncpa [#allocation3], 1

</llo_original>
